<compile_context>
chip_gen: v5e
topology: v5e:2x2
jax: 0.10.0
libtpu: 0.0.40
codegen_flags: <defaults>
</compile_context>

<pallas_src>
import jax
import jax.numpy as jnp
from jax.experimental import pallas as pl
from jax.experimental.pallas import tpu as pltpu

# Original (PyTorch) layer dims and their lane-aligned padded versions.
DIMS = [(114, 800), (800, 400), (400, 200), (200, 98)]
PAD = {114: 128, 800: 896, 400: 512, 200: 256, 98: 128}
D_IN, D_OUT = 114, 98
D_IN_P, D_OUT_P = PAD[D_IN], PAD[D_OUT]

MAX_TILE_ROWS = 512  # bigger tiles pipeline better; ~10 MiB VMEM at 512 rows


def _round_up(n, m):
    return ((n + m - 1) // m) * m


def _choose_tm(B):
    """Batch-tile rows: multiple of 16 (bf16 packs 2 rows/sublane), capped at
    512, and arranged so the grid has >= 2 steps once the batch is big enough
    (v7x has 2 TensorCores; a single tile leaves one idle)."""
    b8 = _round_up(B, 8)
    if b8 <= 16:
        return b8                       # tiny batch: one small tile
    half = _round_up((B + 1) // 2, 16)  # >= 2 grid steps
    return min(half, MAX_TILE_ROWS)


def mlp_kernel(x_ref, w1_ref, b1_ref, w2_ref, b2_ref,
               w3_ref, b3_ref, w4_ref, b4_ref, o_ref):
    """Fused forward for one batch tile: relu(x@W1+b1) ... @W4+b4.

    x arrives as f32 [tm, 114]; it is cast to bf16 and zero-padded to 128
    lanes here (cheap VPU work).  Every matmul accumulates in f32 on the MXU;
    biases are added in f32; output is written in f32.
    """
    x = x_ref[...]                                                  # f32 [tm, 114]
    zpad = jnp.zeros((x.shape[0], D_IN_P - D_IN), jnp.float32)      # [tm, 14]
    h = jnp.concatenate([x, zpad], axis=-1).astype(jnp.bfloat16)    # bf16 [tm, 128]

    layers = ((w1_ref, b1_ref, True),
              (w2_ref, b2_ref, True),
              (w3_ref, b3_ref, True),
              (w4_ref, b4_ref, False))
    for w_ref, b_ref, relu in layers:  # unrolled at trace time (4 layers)
        z = jnp.dot(h, w_ref[...], preferred_element_type=jnp.float32) + b_ref[...]
        h = jnp.maximum(z, 0.0).astype(jnp.bfloat16) if relu else z
    o_ref[...] = h.astype(o_ref.dtype)


def prepare_params(params):
    """One-time packing (NOT per call): transpose PyTorch [out,in] -> [in,out],
    zero-pad every dim to a multiple of 128, cast weights to bf16.
    Zero padding is exact: padded input lanes hit zero weight rows, padded
    output lanes get zero weight columns + zero bias, and ReLU(0) = 0."""
    packed = {}
    for i, (fi, fo) in enumerate(DIMS, start=1):
        fi_p, fo_p = PAD[fi], PAD[fo]
        w = jnp.zeros((fi_p, fo_p), jnp.float32).at[:fi, :fo].set(params[f"w{i}"].T)
        b = jnp.zeros((1, fo_p), jnp.float32).at[:, :fo].set(params[f"b{i}"])
        packed[f"w{i}"] = w.astype(jnp.bfloat16)
        packed[f"b{i}"] = b  # bias stays f32 (added after f32 accumulation)
    return packed


@jax.jit
def mlp_forward(x, packed):
    """x: [B, 114] float32, packed: output of prepare_params. Returns [B, 98] f32."""
    B = x.shape[0]
    tm = _choose_tm(B)
    grid = (pl.cdiv(B, tm),)

    # Weights / biases: constant index_map -> loaded once, VMEM-resident.
    resident = lambda a: pl.BlockSpec(a.shape, lambda i: (0, 0))

    padded_macs = sum(PAD[fi] * PAD[fo] for fi, fo in DIMS)
    flops = 2 * B * padded_macs
    bytes_accessed = (B * D_IN * 4                       # x (f32)
                      + padded_macs * 2                  # bf16 weights
                      + sum(PAD[fo] for _, fo in DIMS) * 4   # f32 biases
                      + B * D_OUT_P * 4)                 # f32 output

    out = pl.pallas_call(
        mlp_kernel,
        out_shape=jax.ShapeDtypeStruct((B, D_OUT_P), jnp.float32),
        grid=grid,
        in_specs=[
            # x: full 114-wide last dim (legal: equals the array dim); cast/pad
            # happens inside the kernel, so no wrapper-side padded copy.
            pl.BlockSpec((tm, D_IN), lambda i: (i, 0)),
            resident(packed["w1"]), resident(packed["b1"]),
            resident(packed["w2"]), resident(packed["b2"]),
            resident(packed["w3"]), resident(packed["b3"]),
            resident(packed["w4"]), resident(packed["b4"]),
        ],
        out_specs=pl.BlockSpec((tm, D_OUT_P), lambda i: (i, 0)),
        compiler_params=pltpu.CompilerParams(
            dimension_semantics=("parallel",),
            vmem_limit_bytes=32 * 1024 * 1024),   # covers v5e's 16 MiB default
        cost_estimate=pl.CostEstimate(
            flops=flops, transcendentals=0, bytes_accessed=bytes_accessed),
    )(x,
      packed["w1"], packed["b1"], packed["w2"], packed["b2"],
      packed["w3"], packed["b3"], packed["w4"], packed["b4"])

    # Lane de-pad only; out-of-range batch rows of a partial last tile were
    # already dropped by the pipeline's masked writeback.
    return out[:, :D_OUT]


def init_params(key):
    """Deterministic init mimicking nn.Linear defaults (uniform +/- 1/sqrt(fan_in))."""
    params = {}
    for i, (fan_in, fan_out) in enumerate(DIMS, start=1):
        key, kw, kb = jax.random.split(key, 3)
        bound = 1.0 / jnp.sqrt(fan_in)
        params[f"w{i}"] = jax.random.uniform(
            kw, (fan_out, fan_in), jnp.float32, -bound, bound)
        params[f"b{i}"] = jax.random.uniform(
            kb, (fan_out,), jnp.float32, -bound, bound)
    return params


def mlp_reference_f32(x, params):
    """Original PyTorch-module semantics, pure f32."""
    h = x
    for i in range(1, 4):
        h = jnp.maximum(h @ params[f"w{i}"].T + params[f"b{i}"], 0.0)
    return h @ params["w4"].T + params["b4"]


def mlp_reference_packed(x, packed):
    """Pure-JAX replica of the kernel's mixed-precision path (bf16 inputs,
    f32 accumulation) — used for the tight numerical check."""
    B = x.shape[0]
    h = jnp.zeros((B, D_IN_P), jnp.float32).at[:, :D_IN].set(x)
    for i in range(1, 5):
        z = jnp.dot(h.astype(jnp.bfloat16), packed[f"w{i}"],
                    preferred_element_type=jnp.float32) + packed[f"b{i}"]
        h = jnp.maximum(z, 0.0) if i < 4 else z
    return h[:, :D_OUT]


if __name__ == "__main__":
    key = jax.random.PRNGKey(0)
    key, kx = jax.random.split(key)
    params = init_params(key)
    packed = prepare_params(params)            # one-time weight packing

    batch = 8
    x = jax.random.normal(kx, (batch, D_IN), jnp.float32)

    y = mlp_forward(x, packed)
    y = jax.block_until_ready(y)
    assert y.shape == (batch, D_OUT), y.shape

    # Tight check vs a pure-JAX replica of the kernel's bf16/f32 path.
    y_q = mlp_reference_packed(x, packed)
    assert jnp.allclose(y, y_q, atol=1e-3, rtol=1e-3), "mismatch vs packed reference"

    # Loose sanity check vs the original full-f32 module semantics
    # (only difference is bf16 weight/activation storage).
    y_f = mlp_reference_f32(x, params)
    assert jnp.allclose(y, y_f, atol=1e-1, rtol=1e-1), "mismatch vs f32 reference"

    print("KERNEL_OK")
</pallas_src>

<mosaic_0001>
module attributes {stable_mosaic.version = 11 : i64} {
  func.func @mlp_kernel(%arg0: i32, %arg1: memref<8x114xf32, #tpu.memory_space<vmem>>, %arg2: memref<128x896xbf16, #tpu.memory_space<vmem>>, %arg3: memref<1x896xf32, #tpu.memory_space<vmem>>, %arg4: memref<896x512xbf16, #tpu.memory_space<vmem>>, %arg5: memref<1x512xf32, #tpu.memory_space<vmem>>, %arg6: memref<512x256xbf16, #tpu.memory_space<vmem>>, %arg7: memref<1x256xf32, #tpu.memory_space<vmem>>, %arg8: memref<256x128xbf16, #tpu.memory_space<vmem>>, %arg9: memref<1x128xf32, #tpu.memory_space<vmem>>, %arg10: memref<8x128xf32, #tpu.memory_space<vmem>>) attributes {dimension_semantics = [#tpu.dimension_semantics<parallel>], iteration_bounds = array<i64: 1>, scalar_prefetch = 0 : i64, scratch_operands = 0 : i64, tpu.core_type = #tpu.core_type<tc>, window_params = [{transform_indices = @transform_0, window_bounds = array<i64: 8, 114>}, {pipeline_mode = #tpu.pipeline_mode<synchronous>, transform_indices = @transform_1, window_bounds = array<i64: 128, 896>}, {pipeline_mode = #tpu.pipeline_mode<synchronous>, transform_indices = @transform_2, window_bounds = array<i64: 1, 896>}, {pipeline_mode = #tpu.pipeline_mode<synchronous>, transform_indices = @transform_3, window_bounds = array<i64: 896, 512>}, {pipeline_mode = #tpu.pipeline_mode<synchronous>, transform_indices = @transform_4, window_bounds = array<i64: 1, 512>}, {pipeline_mode = #tpu.pipeline_mode<synchronous>, transform_indices = @transform_5, window_bounds = array<i64: 512, 256>}, {pipeline_mode = #tpu.pipeline_mode<synchronous>, transform_indices = @transform_6, window_bounds = array<i64: 1, 256>}, {pipeline_mode = #tpu.pipeline_mode<synchronous>, transform_indices = @transform_7, window_bounds = array<i64: 256, 128>}, {pipeline_mode = #tpu.pipeline_mode<synchronous>, transform_indices = @transform_8, window_bounds = array<i64: 1, 128>}, {transform_indices = @transform_9, window_bounds = array<i64: 8, 128>}]} {
    %c0 = arith.constant 0 : index
    %c0_0 = arith.constant 0 : index
    %0 = vector.load %arg1[%c0, %c0_0] : memref<8x114xf32, #tpu.memory_space<vmem>>, vector<8x114xf32>
    %cst = arith.constant 0.000000e+00 : f32
    %1 = vector.broadcast %cst : f32 to vector<8x14xf32>
    %2 = tpu.concatenate %0, %1 in 1 : vector<8x114xf32>, vector<8x14xf32> -> vector<8x128xf32>
    %3 = arith.truncf %2 : vector<8x128xf32> to vector<8x128xbf16>
    %c0_1 = arith.constant 0 : index
    %c0_2 = arith.constant 0 : index
    %4 = vector.load %arg2[%c0_1, %c0_2] : memref<128x896xbf16, #tpu.memory_space<vmem>>, vector<128x896xbf16>
    %cst_3 = arith.constant dense<0.000000e+00> : vector<8x896xf32>
    %5 = tpu.matmul %3, %4, %cst_3 {dimension_numbers = #tpu.dot_dimension_numbers<[1], [0], [0], [1], [0, 0, 1, 1], [], []>} : vector<8x128xbf16>, vector<128x896xbf16>, vector<8x896xf32> -> vector<8x896xf32>
    %c0_4 = arith.constant 0 : index
    %c0_5 = arith.constant 0 : index
    %6 = vector.load %arg3[%c0_4, %c0_5] : memref<1x896xf32, #tpu.memory_space<vmem>>, vector<1x896xf32>
    %7 = vector.broadcast %6 : vector<1x896xf32> to vector<8x896xf32>
    %8 = arith.addf %5, %7 : vector<8x896xf32>
    %cst_6 = arith.constant 0.000000e+00 : f32
    %9 = vector.broadcast %cst_6 : f32 to vector<8x896xf32>
    %10 = arith.maximumf %8, %9 : vector<8x896xf32>
    %11 = arith.truncf %10 : vector<8x896xf32> to vector<8x896xbf16>
    %c0_7 = arith.constant 0 : index
    %c0_8 = arith.constant 0 : index
    %12 = vector.load %arg4[%c0_7, %c0_8] : memref<896x512xbf16, #tpu.memory_space<vmem>>, vector<896x512xbf16>
    %cst_9 = arith.constant dense<0.000000e+00> : vector<8x512xf32>
    %13 = tpu.matmul %11, %12, %cst_9 {dimension_numbers = #tpu.dot_dimension_numbers<[1], [0], [0], [1], [0, 0, 1, 1], [], []>} : vector<8x896xbf16>, vector<896x512xbf16>, vector<8x512xf32> -> vector<8x512xf32>
    %c0_10 = arith.constant 0 : index
    %c0_11 = arith.constant 0 : index
    %14 = vector.load %arg5[%c0_10, %c0_11] : memref<1x512xf32, #tpu.memory_space<vmem>>, vector<1x512xf32>
    %15 = vector.broadcast %14 : vector<1x512xf32> to vector<8x512xf32>
    %16 = arith.addf %13, %15 : vector<8x512xf32>
    %cst_12 = arith.constant 0.000000e+00 : f32
    %17 = vector.broadcast %cst_12 : f32 to vector<8x512xf32>
    %18 = arith.maximumf %16, %17 : vector<8x512xf32>
    %19 = arith.truncf %18 : vector<8x512xf32> to vector<8x512xbf16>
    %c0_13 = arith.constant 0 : index
    %c0_14 = arith.constant 0 : index
    %20 = vector.load %arg6[%c0_13, %c0_14] : memref<512x256xbf16, #tpu.memory_space<vmem>>, vector<512x256xbf16>
    %cst_15 = arith.constant dense<0.000000e+00> : vector<8x256xf32>
    %21 = tpu.matmul %19, %20, %cst_15 {dimension_numbers = #tpu.dot_dimension_numbers<[1], [0], [0], [1], [0, 0, 1, 1], [], []>} : vector<8x512xbf16>, vector<512x256xbf16>, vector<8x256xf32> -> vector<8x256xf32>
    %c0_16 = arith.constant 0 : index
    %c0_17 = arith.constant 0 : index
    %22 = vector.load %arg7[%c0_16, %c0_17] : memref<1x256xf32, #tpu.memory_space<vmem>>, vector<1x256xf32>
    %23 = vector.broadcast %22 : vector<1x256xf32> to vector<8x256xf32>
    %24 = arith.addf %21, %23 : vector<8x256xf32>
    %cst_18 = arith.constant 0.000000e+00 : f32
    %25 = vector.broadcast %cst_18 : f32 to vector<8x256xf32>
    %26 = arith.maximumf %24, %25 : vector<8x256xf32>
    %27 = arith.truncf %26 : vector<8x256xf32> to vector<8x256xbf16>
    %c0_19 = arith.constant 0 : index
    %c0_20 = arith.constant 0 : index
    %28 = vector.load %arg8[%c0_19, %c0_20] : memref<256x128xbf16, #tpu.memory_space<vmem>>, vector<256x128xbf16>
    %cst_21 = arith.constant dense<0.000000e+00> : vector<8x128xf32>
    %29 = tpu.matmul %27, %28, %cst_21 {dimension_numbers = #tpu.dot_dimension_numbers<[1], [0], [0], [1], [0, 0, 1, 1], [], []>} : vector<8x256xbf16>, vector<256x128xbf16>, vector<8x128xf32> -> vector<8x128xf32>
    %c0_22 = arith.constant 0 : index
    %c0_23 = arith.constant 0 : index
    %30 = vector.load %arg9[%c0_22, %c0_23] : memref<1x128xf32, #tpu.memory_space<vmem>>, vector<1x128xf32>
    %31 = vector.broadcast %30 : vector<1x128xf32> to vector<8x128xf32>
    %32 = arith.addf %29, %31 : vector<8x128xf32>
    %c0_24 = arith.constant 0 : index
    %c0_25 = arith.constant 0 : index
    %33 = vector.load %arg10[%c0_24, %c0_25] : memref<8x128xf32, #tpu.memory_space<vmem>>, vector<8x128xf32>
    tpu.vector_store %arg10[%c0_24, %c0_25], %32 {strides = array<i32>} : memref<8x128xf32, #tpu.memory_space<vmem>>, vector<8x128xf32>,
    return
  }
  func.func @transform_0(%arg0: i32) -> (i32, i32) {
    %c0_i32 = arith.constant 0 : i32
    %c0_i32_0 = arith.constant 0 : i32
    return %arg0, %c0_i32 : i32, i32
  }
  func.func @transform_1(%arg0: i32) -> (i32, i32) {
    %c0_i32 = arith.constant 0 : i32
    %c0_i32_0 = arith.constant 0 : i32
    %c0_i32_1 = arith.constant 0 : i32
    return %c0_i32, %c0_i32_0 : i32, i32
  }
  func.func @transform_2(%arg0: i32) -> (i32, i32) {
    %c0_i32 = arith.constant 0 : i32
    %c0_i32_0 = arith.constant 0 : i32
    %c0_i32_1 = arith.constant 0 : i32
    return %c0_i32, %c0_i32_0 : i32, i32
  }
  func.func @transform_3(%arg0: i32) -> (i32, i32) {
    %c0_i32 = arith.constant 0 : i32
    %c0_i32_0 = arith.constant 0 : i32
    %c0_i32_1 = arith.constant 0 : i32
    return %c0_i32, %c0_i32_0 : i32, i32
  }
  func.func @transform_4(%arg0: i32) -> (i32, i32) {
    %c0_i32 = arith.constant 0 : i32
    %c0_i32_0 = arith.constant 0 : i32
    %c0_i32_1 = arith.constant 0 : i32
    return %c0_i32, %c0_i32_0 : i32, i32
  }
  func.func @transform_5(%arg0: i32) -> (i32, i32) {
    %c0_i32 = arith.constant 0 : i32
    %c0_i32_0 = arith.constant 0 : i32
    %c0_i32_1 = arith.constant 0 : i32
    return %c0_i32, %c0_i32_0 : i32, i32
  }
  func.func @transform_6(%arg0: i32) -> (i32, i32) {
    %c0_i32 = arith.constant 0 : i32
    %c0_i32_0 = arith.constant 0 : i32
    %c0_i32_1 = arith.constant 0 : i32
    return %c0_i32, %c0_i32_0 : i32, i32
  }
  func.func @transform_7(%arg0: i32) -> (i32, i32) {
    %c0_i32 = arith.constant 0 : i32
    %c0_i32_0 = arith.constant 0 : i32
    %c0_i32_1 = arith.constant 0 : i32
    return %c0_i32, %c0_i32_0 : i32, i32
  }
  func.func @transform_8(%arg0: i32) -> (i32, i32) {
    %c0_i32 = arith.constant 0 : i32
    %c0_i32_0 = arith.constant 0 : i32
    %c0_i32_1 = arith.constant 0 : i32
    return %c0_i32, %c0_i32_0 : i32, i32
  }
  func.func @transform_9(%arg0: i32) -> (i32, i32) {
    %c0_i32 = arith.constant 0 : i32
    %c0_i32_0 = arith.constant 0 : i32
    return %arg0, %c0_i32 : i32, i32
  }
}

</mosaic_0001>

<llo_original>
// kernel: mlp_forward.1
$region0: #{mlp_forward.1}
  #allocation0 [shape = 'u32[]', space=smem, size = 0x4, offset = 0x4, fixed_abs, tag = 'smem constant byte address 0x4 - core index']
  #allocation1 [shape = 'u32[72,128]{1,0:T(1,128)}', space=vmem, size = 0x9000, scoped, tag = 'internal scratch']
  %s0 = inlined_call_operand.hbm [shape: f32[8,114], index: 0, kind: input, shape index: {}]
  %s1 = inlined_call_operand.hbm [shape: bf16[128,896], index: 1, kind: input, shape index: {}]
  %s2 = inlined_call_operand.hbm [shape: f32[1,896], index: 2, kind: input, shape index: {}]
  %s3 = inlined_call_operand.hbm [shape: bf16[896,512], index: 3, kind: input, shape index: {}]
  %s4 = inlined_call_operand.hbm [shape: f32[1,512], index: 4, kind: input, shape index: {}]
  %s5 = inlined_call_operand.hbm [shape: bf16[512,256], index: 5, kind: input, shape index: {}]
  %s6 = inlined_call_operand.vmem [shape: f32[1,256], index: 6, kind: input, shape index: {}]
  %s7 = inlined_call_operand.hbm [shape: bf16[256,128], index: 7, kind: input, shape index: {}]
  %s8 = inlined_call_operand.vmem [shape: f32[1,128], index: 8, kind: input, shape index: {}]
  %s9 = inlined_call_operand.hbm [shape: f32[8,128], index: 9, kind: output, shape index: {}]
  %s10 = sld [smem:[#allocation0]]
  $region74: #{mlp_forward.1} parent=0
    _
  %s12 = ssub.s32 1, %s10
  %s13 = scalar_select 0, %s12, %s10
  $region1: #{mlp_forward.1} parent=0
    #allocation2 [shape = 'u8[4096]{0}', space=vmem, size = 0x1000, scoped, tag = 'input window, operand 0, single buffered']
    #allocation3 [shape = 's32[1]{0}', space=sflag, size = 0x4, scoped, tag = 'scoped memory for mlp_forward.1']
    #allocation4 [shape = 's32[1]{0}', space=sflag, size = 0x4, scoped, tag = 'scoped memory for mlp_forward.1']
    #allocation5 [shape = 'u8[229376]{0}', space=vmem, size = 0x38000, scoped, tag = 'input window, operand 1, single buffered']
    #allocation6 [shape = 's32[1]{0}', space=sflag, size = 0x4, scoped, tag = 'scoped memory for mlp_forward.1']
    #allocation7 [shape = 'u8[3584]{0}', space=vmem, size = 0x1000, scoped, tag = 'input window, operand 2, single buffered']
    #allocation8 [shape = 'u8[917504]{0}', space=vmem, size = 0xe0000, scoped, tag = 'input window, operand 3, single buffered']
    #allocation9 [shape = 's32[1]{0}', space=sflag, size = 0x4, scoped, tag = 'scoped memory for mlp_forward.1']
    #allocation10 [shape = 'u8[2048]{0}', space=vmem, size = 0x800, scoped, tag = 'input window, operand 4, single buffered']
    #allocation11 [shape = 'u8[262144]{0}', space=vmem, size = 0x40000, scoped, tag = 'input window, operand 5, single buffered']
    #allocation12 [shape = 's32[1]{0}', space=sflag, size = 0x4, scoped, tag = 'scoped memory for mlp_forward.1']
    #allocation13 [shape = 'u8[65536]{0}', space=vmem, size = 0x10000, scoped, tag = 'input window, operand 7, single buffered']
    #allocation14 [shape = 'u8[4096]{0}', space=vmem, size = 0x1000, scoped, tag = 'output window, operand 0, single buffered']
    %14 = vsyncpa [#allocation3], 0
    %15 = vsyncpa [#allocation6], 0
    %16 = vsyncpa [#allocation9], 0
    %17 = vsyncpa [#allocation12], 0
    %18 = vsyncpa [#allocation4], 0
    // Predicated region
    $region2: #{mlp_forward.1} parent=1 // pred_check
      _
    $region3: #{mlp_forward.1} parent=1 // pred_check_branch
      %20 = sbr.rel (0) target = $region5
    $region4: #{mlp_forward.1} parent=1 // pred_region
      %22 = vsyncadd [#allocation3], 0
      %s24 = sshll.u32 %s0, 4
      %s25 = int_to_ptr.hbm [resolvable:$true] %s24
      %s26 = sshll.u32 [#allocation2], 4
      %s27 = int_to_ptr.vmem [resolvable:$true] %s26
      %29 = dma.hbm_to_vmem [thread:$0]  %s25, 128, %s27, [#allocation3]
    $region5: #{mlp_forward.1} parent=1 // pred_fallthru
      _
    // Predicated region
    $region6: #{mlp_forward.1} parent=1 // pred_check
      _
    $region7: #{mlp_forward.1} parent=1 // pred_check_branch
      %31 = sbr.rel (0) target = $region9
    $region8: #{mlp_forward.1} parent=1 // pred_region
      %33 = vsyncadd [#allocation6], 0
      %s34 = sshll.u32 %s1, 4
      %s35 = int_to_ptr.hbm [resolvable:$true] %s34
      %s36 = sshll.u32 [#allocation5], 4
      %s37 = int_to_ptr.vmem [resolvable:$true] %s36
      %42 = dma.hbm_to_vmem [thread:$0]  %s35, 7168, %s37, [#allocation6], 448, 448, 28
    $region9: #{mlp_forward.1} parent=1 // pred_fallthru
      _
    // Predicated region
    $region10: #{mlp_forward.1} parent=1 // pred_check
      _
    $region11: #{mlp_forward.1} parent=1 // pred_check_branch
      %44 = sbr.rel (0) target = $region13
    $region12: #{mlp_forward.1} parent=1 // pred_region
      %46 = vsyncadd [#allocation6], 0
      %s48 = sshll.u32 %s2, 4
      %s49 = int_to_ptr.hbm [resolvable:$true] %s48
      %s50 = sshll.u32 [#allocation7], 4
      %s51 = int_to_ptr.vmem [resolvable:$true] %s50
      %53 = dma.hbm_to_vmem [thread:$0]  %s49, 112, %s51, [#allocation6]
    $region13: #{mlp_forward.1} parent=1 // pred_fallthru
      _
    // Predicated region
    $region14: #{mlp_forward.1} parent=1 // pred_check
      _
    $region15: #{mlp_forward.1} parent=1 // pred_check_branch
      %55 = sbr.rel (0) target = $region17
    $region16: #{mlp_forward.1} parent=1 // pred_region
      %57 = vsyncadd [#allocation9], 0
      %s58 = sshll.u32 %s3, 4
      %s59 = int_to_ptr.hbm [resolvable:$true] %s58
      %s60 = sshll.u32 [#allocation8], 4
      %s61 = int_to_ptr.vmem [resolvable:$true] %s60
      %66 = dma.hbm_to_vmem [thread:$0]  %s59, 28672, %s61, [#allocation9], 256, 256, 16
    $region17: #{mlp_forward.1} parent=1 // pred_fallthru
      _
    // Predicated region
    $region18: #{mlp_forward.1} parent=1 // pred_check
      _
    $region19: #{mlp_forward.1} parent=1 // pred_check_branch
      %68 = sbr.rel (0) target = $region21
    $region20: #{mlp_forward.1} parent=1 // pred_region
      %70 = vsyncadd [#allocation9], 0
      %s72 = sshll.u32 %s4, 4
      %s73 = int_to_ptr.hbm [resolvable:$true] %s72
      %s74 = sshll.u32 [#allocation10], 4
      %s75 = int_to_ptr.vmem [resolvable:$true] %s74
      %77 = dma.hbm_to_vmem [thread:$0]  %s73, 64, %s75, [#allocation9]
    $region21: #{mlp_forward.1} parent=1 // pred_fallthru
      _
    // Predicated region
    $region22: #{mlp_forward.1} parent=1 // pred_check
      _
    $region23: #{mlp_forward.1} parent=1 // pred_check_branch
      %79 = sbr.rel (0) target = $region25
    $region24: #{mlp_forward.1} parent=1 // pred_region
      %81 = vsyncadd [#allocation12], 0
      %s82 = sshll.u32 %s5, 4
      %s83 = int_to_ptr.hbm [resolvable:$true] %s82
      %s84 = sshll.u32 [#allocation11], 4
      %s85 = int_to_ptr.vmem [resolvable:$true] %s84
      %90 = dma.hbm_to_vmem [thread:$0]  %s83, 8192, %s85, [#allocation12], 128, 128, 8
    $region25: #{mlp_forward.1} parent=1 // pred_fallthru
      _
    // Predicated region
    $region26: #{mlp_forward.1} parent=1 // pred_check
      _
    $region27: #{mlp_forward.1} parent=1 // pred_check_branch
      %92 = sbr.rel (0) target = $region29
    $region28: #{mlp_forward.1} parent=1 // pred_region
      _
    $region29: #{mlp_forward.1} parent=1 // pred_fallthru
      _
    // Predicated region
    $region30: #{mlp_forward.1} parent=1 // pred_check
      _
    $region31: #{mlp_forward.1} parent=1 // pred_check_branch
      %94 = sbr.rel (0) target = $region33
    $region32: #{mlp_forward.1} parent=1 // pred_region
      %96 = vsyncadd [#allocation12], 0
      %s97 = sshll.u32 %s7, 4
      %s98 = int_to_ptr.hbm [resolvable:$true] %s97
      %s99 = sshll.u32 [#allocation13], 4
      %s100 = int_to_ptr.vmem [resolvable:$true] %s99
      %105 = dma.hbm_to_vmem [thread:$0]  %s98, 2048, %s100, [#allocation12], 64, 64, 4
    $region33: #{mlp_forward.1} parent=1 // pred_fallthru
      _
    // Predicated region
    $region34: #{mlp_forward.1} parent=1 // pred_check
      _
    $region35: #{mlp_forward.1} parent=1 // pred_check_branch
      %107 = sbr.rel (0) target = $region37
    $region36: #{mlp_forward.1} parent=1 // pred_region
      _
    $region37: #{mlp_forward.1} parent=1 // pred_fallthru
      _
    // Predicated region
    $region38: #{mlp_forward.1} parent=1 // pred_check
      _
    $region39: #{mlp_forward.1} parent=1 // pred_check_branch
      %109 = sbr.rel (0) target = $region41
    $region40: #{mlp_forward.1} parent=1 // pred_region
      %111 = dma.done [#allocation3], 128
    $region41: #{mlp_forward.1} parent=1 // pred_fallthru
      _
    // Predicated region
    $region42: #{mlp_forward.1} parent=1 // pred_check
      _
    $region43: #{mlp_forward.1} parent=1 // pred_check_branch
      %113 = sbr.rel (0) target = $region45
    $region44: #{mlp_forward.1} parent=1 // pred_region
      %115 = dma.done [#allocation6], 7168
    $region45: #{mlp_forward.1} parent=1 // pred_fallthru
      _
    // Predicated region
    $region46: #{mlp_forward.1} parent=1 // pred_check
      _
    $region47: #{mlp_forward.1} parent=1 // pred_check_branch
      %117 = sbr.rel (0) target = $region49
    $region48: #{mlp_forward.1} parent=1 // pred_region
      %119 = dma.done [#allocation6], 112
    $region49: #{mlp_forward.1} parent=1 // pred_fallthru
      _
    // Predicated region
    $region50: #{mlp_forward.1} parent=1 // pred_check
      _
    $region51: #{mlp_forward.1} parent=1 // pred_check_branch
      %121 = sbr.rel (0) target = $region53
    $region52: #{mlp_forward.1} parent=1 // pred_region
      %123 = dma.done [#allocation9], 28672
    $region53: #{mlp_forward.1} parent=1 // pred_fallthru
      _
    // Predicated region
    $region54: #{mlp_forward.1} parent=1 // pred_check
      _
    $region55: #{mlp_forward.1} parent=1 // pred_check_branch
      %125 = sbr.rel (0) target = $region57
    $region56: #{mlp_forward.1} parent=1 // pred_region
      %127 = dma.done [#allocation9], 64
    $region57: #{mlp_forward.1} parent=1 // pred_fallthru
      _
    // Predicated region
    $region58: #{mlp_forward.1} parent=1 // pred_check
      _
    $region59: #{mlp_forward.1} parent=1 // pred_check_branch
      %129 = sbr.rel (0) target = $region61
    $region60: #{mlp_forward.1} parent=1 // pred_region
      %131 = dma.done [#allocation12], 8192
    $region61: #{mlp_forward.1} parent=1 // pred_fallthru
      _
    // Predicated region
    $region62: #{mlp_forward.1} parent=1 // pred_check
      _
    $region63: #{mlp_forward.1} parent=1 // pred_check_branch
      %133 = sbr.rel (0) target = $region65
    $region64: #{mlp_forward.1} parent=1 // pred_region
      %135 = dma.done [#allocation12], 2048
    $region65: #{mlp_forward.1} parent=1 // pred_fallthru
      _
    %v136 = vld [vmem:[#allocation2] sm:$0xff]
    %vm137 = vcmask 932864
    %v138 = vsel %vm137, %v136, 0.0
    %v139 = vpack.c.bf16 %v138, %v138
    %v140 = vld [vmem:[#allocation5] sm:$0xff]
    %v141 = vld [vmem:[#allocation5 + $0x8] sm:$0xff]
    %v142 = vld [vmem:[#allocation5 + $0x10] sm:$0xff]
    %v143 = vld [vmem:[#allocation5 + $0x18] sm:$0xf]
    %v144 = vld [vmem:[#allocation5 + $0x1c] sm:$0xff]
    %v145 = vld [vmem:[#allocation5 + $0x24] sm:$0xff]
    %v146 = vld [vmem:[#allocation5 + $0x2c] sm:$0xff]
    %v147 = vld [vmem:[#allocation5 + $0x34] sm:$0xf]
    %v148 = vld [vmem:[#allocation5 + $0x38] sm:$0xff]
    %v149 = vld [vmem:[#allocation5 + $0x40] sm:$0xff]
    %v150 = vld [vmem:[#allocation5 + $0x48] sm:$0xff]
    %v151 = vld [vmem:[#allocation5 + $0x50] sm:$0xf]
    %v152 = vld [vmem:[#allocation5 + $0x54] sm:$0xff]
    %v153 = vld [vmem:[#allocation5 + $0x5c] sm:$0xff]
    %v154 = vld [vmem:[#allocation5 + $0x64] sm:$0xff]
    %v155 = vld [vmem:[#allocation5 + $0x6c] sm:$0xf]
    %v156 = vld [vmem:[#allocation5 + $0x70] sm:$0xff]
    %v157 = vld [vmem:[#allocation5 + $0x78] sm:$0xff]
    %v158 = vld [vmem:[#allocation5 + $0x80] sm:$0xff]
    %v159 = vld [vmem:[#allocation5 + $0x88] sm:$0xf]
    %v160 = vld [vmem:[#allocation5 + $0x8c] sm:$0xff]
    %v161 = vld [vmem:[#allocation5 + $0x94] sm:$0xff]
    %v162 = vld [vmem:[#allocation5 + $0x9c] sm:$0xff]
    %v163 = vld [vmem:[#allocation5 + $0xa4] sm:$0xf]
    %v164 = vld [vmem:[#allocation5 + $0xa8] sm:$0xff]
    %v165 = vld [vmem:[#allocation5 + $0xb0] sm:$0xff]
    %v166 = vld [vmem:[#allocation5 + $0xb8] sm:$0xff]
    %v167 = vld [vmem:[#allocation5 + $0xc0] sm:$0xf]
    %v168 = vld [vmem:[#allocation5 + $0xc4] sm:$0xff]
    %v169 = vld [vmem:[#allocation5 + $0xcc] sm:$0xff]
    %v170 = vld [vmem:[#allocation5 + $0xd4] sm:$0xff]
    %v171 = vld [vmem:[#allocation5 + $0xdc] sm:$0xf]
    %v172 = vld [vmem:[#allocation5 + $0xe0] sm:$0xff]
    %v173 = vld [vmem:[#allocation5 + $0xe8] sm:$0xff]
    %v174 = vld [vmem:[#allocation5 + $0xf0] sm:$0xff]
    %v175 = vld [vmem:[#allocation5 + $0xf8] sm:$0xf]
    %v176 = vld [vmem:[#allocation5 + $0xfc] sm:$0xff]
    %v177 = vld [vmem:[#allocation5 + $0x104] sm:$0xff]
    %v178 = vld [vmem:[#allocation5 + $0x10c] sm:$0xff]
    %v179 = vld [vmem:[#allocation5 + $0x114] sm:$0xf]
    %v180 = vld [vmem:[#allocation5 + $0x118] sm:$0xff]
    %v181 = vld [vmem:[#allocation5 + $0x120] sm:$0xff]
    %v182 = vld [vmem:[#allocation5 + $0x128] sm:$0xff]
    %v183 = vld [vmem:[#allocation5 + $0x130] sm:$0xf]
    %v184 = vld [vmem:[#allocation5 + $0x134] sm:$0xff]
    %v185 = vld [vmem:[#allocation5 + $0x13c] sm:$0xff]
    %v186 = vld [vmem:[#allocation5 + $0x144] sm:$0xff]
    %v187 = vld [vmem:[#allocation5 + $0x14c] sm:$0xf]
    %v188 = vld [vmem:[#allocation5 + $0x150] sm:$0xff]
    %v189 = vld [vmem:[#allocation5 + $0x158] sm:$0xff]
    %v190 = vld [vmem:[#allocation5 + $0x160] sm:$0xff]
    %v191 = vld [vmem:[#allocation5 + $0x168] sm:$0xf]
    %v192 = vld [vmem:[#allocation5 + $0x16c] sm:$0xff]
    %v193 = vld [vmem:[#allocation5 + $0x174] sm:$0xff]
    %v194 = vld [vmem:[#allocation5 + $0x17c] sm:$0xff]
    %v195 = vld [vmem:[#allocation5 + $0x184] sm:$0xf]
    %v196 = vld [vmem:[#allocation5 + $0x188] sm:$0xff]
    %v197 = vld [vmem:[#allocation5 + $0x190] sm:$0xff]
    %v198 = vld [vmem:[#allocation5 + $0x198] sm:$0xff]
    %v199 = vld [vmem:[#allocation5 + $0x1a0] sm:$0xf]
    %v200 = vld [vmem:[#allocation5 + $0x1a4] sm:$0xff]
    %v201 = vld [vmem:[#allocation5 + $0x1ac] sm:$0xff]
    %v202 = vld [vmem:[#allocation5 + $0x1b4] sm:$0xff]
    %v203 = vld [vmem:[#allocation5 + $0x1bc] sm:$0xf]
    %v204 = vld [vmem:[#allocation7] sm:$0xff]
    %v206 = vperm.slane %v204, 0
    %v207 = vperm.slane %v204, 1
    %v208 = vperm.slane %v204, 2
    %v209 = vperm.slane %v204, 3
    %v210 = vperm.slane %v204, 4
    %v211 = vperm.slane %v204, 5
    %v212 = vperm.slane %v204, 6
    %v284 = vunpack.c.l.b16 %v140
    %v285 = vunpack.c.h.b16 %v140
    %v286 = vunpack.c.l.b16 %v141
    %v287 = vunpack.c.h.b16 %v141
    %v288 = vunpack.c.l.b16 %v142
    %v289 = vunpack.c.h.b16 %v142
    %v290 = vunpack.c.l.b16 %v143
    %v291 = vunpack.c.l.b16 %v144
    %v292 = vunpack.c.h.b16 %v144
    %v293 = vunpack.c.l.b16 %v145
    %v294 = vunpack.c.h.b16 %v145
    %v295 = vunpack.c.l.b16 %v146
    %v296 = vunpack.c.h.b16 %v146
    %v297 = vunpack.c.l.b16 %v147
    %v298 = vunpack.c.l.b16 %v148
    %v299 = vunpack.c.h.b16 %v148
    %v300 = vunpack.c.l.b16 %v149
    %v301 = vunpack.c.h.b16 %v149
    %v302 = vunpack.c.l.b16 %v150
    %v303 = vunpack.c.h.b16 %v150
    %v304 = vunpack.c.l.b16 %v151
    %v305 = vunpack.c.l.b16 %v152
    %v306 = vunpack.c.h.b16 %v152
    %v307 = vunpack.c.l.b16 %v153
    %v308 = vunpack.c.h.b16 %v153
    %v309 = vunpack.c.l.b16 %v154
    %v310 = vunpack.c.h.b16 %v154
    %v311 = vunpack.c.l.b16 %v155
    %v312 = vunpack.c.l.b16 %v156
    %v313 = vunpack.c.h.b16 %v156
    %v314 = vunpack.c.l.b16 %v157
    %v315 = vunpack.c.h.b16 %v157
    %v316 = vunpack.c.l.b16 %v158
    %v317 = vunpack.c.h.b16 %v158
    %v318 = vunpack.c.l.b16 %v159
    %v319 = vunpack.c.l.b16 %v160
    %v320 = vunpack.c.h.b16 %v160
    %v321 = vunpack.c.l.b16 %v161
    %v322 = vunpack.c.h.b16 %v161
    %v323 = vunpack.c.l.b16 %v162
    %v324 = vunpack.c.h.b16 %v162
    %v325 = vunpack.c.l.b16 %v163
    %v326 = vunpack.c.l.b16 %v164
    %v327 = vunpack.c.h.b16 %v164
    %v328 = vunpack.c.l.b16 %v165
    %v329 = vunpack.c.h.b16 %v165
    %v330 = vunpack.c.l.b16 %v166
    %v331 = vunpack.c.h.b16 %v166
    %v332 = vunpack.c.l.b16 %v167
    %v333 = vunpack.c.l.b16 %v168
    %v334 = vunpack.c.h.b16 %v168
    %v335 = vunpack.c.l.b16 %v169
    %v336 = vunpack.c.h.b16 %v169
    %v337 = vunpack.c.l.b16 %v170
    %v338 = vunpack.c.h.b16 %v170
    %v339 = vunpack.c.l.b16 %v171
    %v340 = vunpack.c.l.b16 %v172
    %v341 = vunpack.c.h.b16 %v172
    %v342 = vunpack.c.l.b16 %v173
    %v343 = vunpack.c.h.b16 %v173
    %v344 = vunpack.c.l.b16 %v174
    %v345 = vunpack.c.h.b16 %v174
    %v346 = vunpack.c.l.b16 %v175
    %v347 = vunpack.c.l.b16 %v176
    %v348 = vunpack.c.h.b16 %v176
    %v349 = vunpack.c.l.b16 %v177
    %v350 = vunpack.c.h.b16 %v177
    %v351 = vunpack.c.l.b16 %v178
    %v352 = vunpack.c.h.b16 %v178
    %v353 = vunpack.c.l.b16 %v179
    %v354 = vunpack.c.l.b16 %v180
    %v355 = vunpack.c.h.b16 %v180
    %v356 = vunpack.c.l.b16 %v181
    %v357 = vunpack.c.h.b16 %v181
    %v358 = vunpack.c.l.b16 %v182
    %v359 = vunpack.c.h.b16 %v182
    %v360 = vunpack.c.l.b16 %v183
    %v361 = vunpack.c.l.b16 %v184
    %v362 = vunpack.c.h.b16 %v184
    %v363 = vunpack.c.l.b16 %v185
    %v364 = vunpack.c.h.b16 %v185
    %v365 = vunpack.c.l.b16 %v186
    %v366 = vunpack.c.h.b16 %v186
    %v367 = vunpack.c.l.b16 %v187
    %v368 = vunpack.c.l.b16 %v188
    %v369 = vunpack.c.h.b16 %v188
    %v370 = vunpack.c.l.b16 %v189
    %v371 = vunpack.c.h.b16 %v189
    %v372 = vunpack.c.l.b16 %v190
    %v373 = vunpack.c.h.b16 %v190
    %v374 = vunpack.c.l.b16 %v191
    %v375 = vunpack.c.l.b16 %v192
    %v376 = vunpack.c.h.b16 %v192
    %v377 = vunpack.c.l.b16 %v193
    %v378 = vunpack.c.h.b16 %v193
    %v379 = vunpack.c.l.b16 %v194
    %v380 = vunpack.c.h.b16 %v194
    %v381 = vunpack.c.l.b16 %v195
    %v382 = vunpack.c.l.b16 %v196
    %v383 = vunpack.c.h.b16 %v196
    %v384 = vunpack.c.l.b16 %v197
    %v385 = vunpack.c.h.b16 %v197
    %v386 = vunpack.c.l.b16 %v198
    %v387 = vunpack.c.h.b16 %v198
    %v388 = vunpack.c.l.b16 %v199
    %v389 = vunpack.c.l.b16 %v200
    %v390 = vunpack.c.h.b16 %v200
    %v391 = vunpack.c.l.b16 %v201
    %v392 = vunpack.c.h.b16 %v201
    %v393 = vunpack.c.l.b16 %v202
    %v394 = vunpack.c.h.b16 %v202
    %v395 = vunpack.c.l.b16 %v203
    %v396 = vpack.c.b16 %v291, %v284
    %v397 = vpack.c.b16 %v292, %v285
    %v398 = vpack.c.b16 %v293, %v286
    %v399 = vpack.c.b16 %v294, %v287
    %v400 = vpack.c.b16 %v295, %v288
    %v401 = vpack.c.b16 %v296, %v289
    %v402 = vpack.c.b16 %v297, %v290
    %v403 = vpack.c.b16 %v305, %v298
    %v404 = vpack.c.b16 %v306, %v299
    %v405 = vpack.c.b16 %v307, %v300
    %v406 = vpack.c.b16 %v308, %v301
    %v407 = vpack.c.b16 %v309, %v302
    %v408 = vpack.c.b16 %v310, %v303
    %v409 = vpack.c.b16 %v311, %v304
    %v410 = vpack.c.b16 %v319, %v312
    %v411 = vpack.c.b16 %v320, %v313
    %v412 = vpack.c.b16 %v321, %v314
    %v413 = vpack.c.b16 %v322, %v315
    %v414 = vpack.c.b16 %v323, %v316
    %v415 = vpack.c.b16 %v324, %v317
    %v416 = vpack.c.b16 %v325, %v318
    %v417 = vpack.c.b16 %v333, %v326
    %v418 = vpack.c.b16 %v334, %v327
    %v419 = vpack.c.b16 %v335, %v328
    %v420 = vpack.c.b16 %v336, %v329
    %v421 = vpack.c.b16 %v337, %v330
    %v422 = vpack.c.b16 %v338, %v331
    %v423 = vpack.c.b16 %v339, %v332
    %v424 = vpack.c.b16 %v347, %v340
    %v425 = vpack.c.b16 %v348, %v341
    %v426 = vpack.c.b16 %v349, %v342
    %v427 = vpack.c.b16 %v350, %v343
    %v428 = vpack.c.b16 %v351, %v344
    %v429 = vpack.c.b16 %v352, %v345
    %v430 = vpack.c.b16 %v353, %v346
    %v431 = vpack.c.b16 %v361, %v354
    %v432 = vpack.c.b16 %v362, %v355
    %v433 = vpack.c.b16 %v363, %v356
    %v434 = vpack.c.b16 %v364, %v357
    %v435 = vpack.c.b16 %v365, %v358
    %v436 = vpack.c.b16 %v366, %v359
    %v437 = vpack.c.b16 %v367, %v360
    %v438 = vpack.c.b16 %v375, %v368
    %v439 = vpack.c.b16 %v376, %v369
    %v440 = vpack.c.b16 %v377, %v370
    %v441 = vpack.c.b16 %v378, %v371
    %v442 = vpack.c.b16 %v379, %v372
    %v443 = vpack.c.b16 %v380, %v373
    %v444 = vpack.c.b16 %v381, %v374
    %v445 = vpack.c.b16 %v389, %v382
    %v446 = vpack.c.b16 %v390, %v383
    %v447 = vpack.c.b16 %v391, %v384
    %v448 = vpack.c.b16 %v392, %v385
    %v449 = vpack.c.b16 %v393, %v386
    %v450 = vpack.c.b16 %v394, %v387
    %v451 = vpack.c.b16 %v395, %v388
    %508 = vmatpush.bf16.msra.mxu0 %v445
    %509 = vmatpush.bf16.msra.mxu0 %v438
    %510 = vmatpush.bf16.msra.mxu0 %v431
    %511 = vmatpush.bf16.msra.mxu0 %v424
    %512 = vmatpush.bf16.msra.mxu0 %v417
    %513 = vmatpush.bf16.msra.mxu0 %v410
    %514 = vmatpush.bf16.msra.mxu0 %v403
    %515 = vmatpush.bf16.msra.mxu0 %v396
    %516 = vmatmul.bf16.gmra.mxu0 %v139
    %v517 = vpop.f32.mrf.mxu0
    %v518 = vadd.f32 %v206, %v517
    %v519 = vpop.f32.mrf.mxu0
    %520 = vdwg.mxu0
    %521 = vmatpush.bf16.msra.mxu0 %v446
    %522 = vmatpush.bf16.msra.mxu0 %v439
    %523 = vmatpush.bf16.msra.mxu0 %v432
    %524 = vmatpush.bf16.msra.mxu0 %v425
    %525 = vmatpush.bf16.msra.mxu0 %v418
    %526 = vmatpush.bf16.msra.mxu0 %v411
    %527 = vmatpush.bf16.msra.mxu0 %v404
    %528 = vmatpush.bf16.msra.mxu0 %v397
    %529 = vmatmul.bf16.gmra.mxu0 %v139
    %v530 = vpop.f32.mrf.mxu0
    %v531 = vadd.f32 %v207, %v530
    %v532 = vpop.f32.mrf.mxu0
    %533 = vdwg.mxu0
    %534 = vmatpush.bf16.msra.mxu0 %v447
    %535 = vmatpush.bf16.msra.mxu0 %v440
    %536 = vmatpush.bf16.msra.mxu0 %v433
    %537 = vmatpush.bf16.msra.mxu0 %v426
    %538 = vmatpush.bf16.msra.mxu0 %v419
    %539 = vmatpush.bf16.msra.mxu0 %v412
    %540 = vmatpush.bf16.msra.mxu0 %v405
    %541 = vmatpush.bf16.msra.mxu0 %v398
    %542 = vmatmul.bf16.gmra.mxu0 %v139
    %v543 = vpop.f32.mrf.mxu0
    %v544 = vadd.f32 %v208, %v543
    %v545 = vpop.f32.mrf.mxu0
    %546 = vdwg.mxu0
    %547 = vmatpush.bf16.msra.mxu0 %v448
    %548 = vmatpush.bf16.msra.mxu0 %v441
    %549 = vmatpush.bf16.msra.mxu0 %v434
    %550 = vmatpush.bf16.msra.mxu0 %v427
    %551 = vmatpush.bf16.msra.mxu0 %v420
    %552 = vmatpush.bf16.msra.mxu0 %v413
    %553 = vmatpush.bf16.msra.mxu0 %v406
    %554 = vmatpush.bf16.msra.mxu0 %v399
    %555 = vmatmul.bf16.gmra.mxu0 %v139
    %v556 = vpop.f32.mrf.mxu0
    %v557 = vadd.f32 %v209, %v556
    %v558 = vpop.f32.mrf.mxu0
    %559 = vdwg.mxu0
    %560 = vmatpush.bf16.msra.mxu0 %v449
    %561 = vmatpush.bf16.msra.mxu0 %v442
    %562 = vmatpush.bf16.msra.mxu0 %v435
    %563 = vmatpush.bf16.msra.mxu0 %v428
    %564 = vmatpush.bf16.msra.mxu0 %v421
    %565 = vmatpush.bf16.msra.mxu0 %v414
    %566 = vmatpush.bf16.msra.mxu0 %v407
    %567 = vmatpush.bf16.msra.mxu0 %v400
    %568 = vmatmul.bf16.gmra.mxu0 %v139
    %v569 = vpop.f32.mrf.mxu0
    %v570 = vadd.f32 %v210, %v569
    %v571 = vpop.f32.mrf.mxu0
    %572 = vdwg.mxu0
    %573 = vmatpush.bf16.msra.mxu0 %v450
    %574 = vmatpush.bf16.msra.mxu0 %v443
    %575 = vmatpush.bf16.msra.mxu0 %v436
    %576 = vmatpush.bf16.msra.mxu0 %v429
    %577 = vmatpush.bf16.msra.mxu0 %v422
    %578 = vmatpush.bf16.msra.mxu0 %v415
    %579 = vmatpush.bf16.msra.mxu0 %v408
    %580 = vmatpush.bf16.msra.mxu0 %v401
    %581 = vmatmul.bf16.gmra.mxu0 %v139
    %v582 = vpop.f32.mrf.mxu0
    %v583 = vadd.f32 %v211, %v582
    %v584 = vpop.f32.mrf.mxu0
    %585 = vdwg.mxu0
    %586 = vmatpush.bf16.msra.mxu0 %v451
    %587 = vmatpush.bf16.msra.mxu0 %v444
    %588 = vmatpush.bf16.msra.mxu0 %v437
    %589 = vmatpush.bf16.msra.mxu0 %v430
    %590 = vmatpush.bf16.msra.mxu0 %v423
    %591 = vmatpush.bf16.msra.mxu0 %v416
    %592 = vmatpush.bf16.msra.mxu0 %v409
    %593 = vmatpush.bf16.msra.mxu0 %v402
    %594 = vmatmul.bf16.gmra.mxu0 %v139
    %v595 = vpop.f32.mrf.mxu0
    %v596 = vadd.f32 %v212, %v595
    %v597 = vpop.f32.mrf.mxu0
    %598 = vdwg.mxu0
    %v599 = vmax.f32 %v518, 0.0
    %v600 = vmax.f32 %v531, 0.0
    %v601 = vmax.f32 %v544, 0.0
    %v602 = vmax.f32 %v557, 0.0
    %v603 = vmax.f32 %v570, 0.0
    %v604 = vmax.f32 %v583, 0.0
    %v605 = vmax.f32 %v596, 0.0
    %v606 = vpack.c.bf16 %v599, %v599
    %v607 = vpack.c.bf16 %v600, %v600
    %v608 = vpack.c.bf16 %v601, %v601
    %v609 = vpack.c.bf16 %v602, %v602
    %v610 = vpack.c.bf16 %v603, %v603
    %v611 = vpack.c.bf16 %v604, %v604
    %v612 = vpack.c.bf16 %v605, %v605
    %v613 = vld [vmem:[#allocation8] sm:$0xff]
    %v614 = vld [vmem:[#allocation8 + $0x8] sm:$0xff]
    %v615 = vld [vmem:[#allocation8 + $0x10] sm:$0xff]
    %v616 = vld [vmem:[#allocation8 + $0x18] sm:$0xff]
    %v617 = vld [vmem:[#allocation8 + $0x20] sm:$0xff]
    %v618 = vld [vmem:[#allocation8 + $0x28] sm:$0xff]
    %v619 = vld [vmem:[#allocation8 + $0x30] sm:$0xff]
    %v620 = vld [vmem:[#allocation8 + $0x38] sm:$0xff]
    %v621 = vld [vmem:[#allocation8 + $0x40] sm:$0xff]
    %v622 = vld [vmem:[#allocation8 + $0x48] sm:$0xff]
    %v623 = vld [vmem:[#allocation8 + $0x50] sm:$0xff]
    %v624 = vld [vmem:[#allocation8 + $0x58] sm:$0xff]
    %v625 = vld [vmem:[#allocation8 + $0x60] sm:$0xff]
    %v626 = vld [vmem:[#allocation8 + $0x68] sm:$0xff]
    %v627 = vld [vmem:[#allocation8 + $0x70] sm:$0xff]
    %v628 = vld [vmem:[#allocation8 + $0x78] sm:$0xff]
    %v629 = vld [vmem:[#allocation8 + $0x80] sm:$0xff]
    %v630 = vld [vmem:[#allocation8 + $0x88] sm:$0xff]
    %v631 = vld [vmem:[#allocation8 + $0x90] sm:$0xff]
    %v632 = vld [vmem:[#allocation8 + $0x98] sm:$0xff]
    %v633 = vld [vmem:[#allocation8 + $0xa0] sm:$0xff]
    %v634 = vld [vmem:[#allocation8 + $0xa8] sm:$0xff]
    %v635 = vld [vmem:[#allocation8 + $0xb0] sm:$0xff]
    %v636 = vld [vmem:[#allocation8 + $0xb8] sm:$0xff]
    %v637 = vld [vmem:[#allocation8 + $0xc0] sm:$0xff]
    %v638 = vld [vmem:[#allocation8 + $0xc8] sm:$0xff]
    %v639 = vld [vmem:[#allocation8 + $0xd0] sm:$0xff]
    %v640 = vld [vmem:[#allocation8 + $0xd8] sm:$0xff]
    %v641 = vld [vmem:[#allocation8 + $0xe0] sm:$0xff]
    %v642 = vld [vmem:[#allocation8 + $0xe8] sm:$0xff]
    %v643 = vld [vmem:[#allocation8 + $0xf0] sm:$0xff]
    %v644 = vld [vmem:[#allocation8 + $0xf8] sm:$0xff]
    %v645 = vld [vmem:[#allocation8 + $0x100] sm:$0xff]
    %v646 = vld [vmem:[#allocation8 + $0x108] sm:$0xff]
    %v647 = vld [vmem:[#allocation8 + $0x110] sm:$0xff]
    %v648 = vld [vmem:[#allocation8 + $0x118] sm:$0xff]
    %v649 = vld [vmem:[#allocation8 + $0x120] sm:$0xff]
    %v650 = vld [vmem:[#allocation8 + $0x128] sm:$0xff]
    %v651 = vld [vmem:[#allocation8 + $0x130] sm:$0xff]
    %v652 = vld [vmem:[#allocation8 + $0x138] sm:$0xff]
    %v653 = vld [vmem:[#allocation8 + $0x140] sm:$0xff]
    %v654 = vld [vmem:[#allocation8 + $0x148] sm:$0xff]
    %v655 = vld [vmem:[#allocation8 + $0x150] sm:$0xff]
    %v656 = vld [vmem:[#allocation8 + $0x158] sm:$0xff]
    %v657 = vld [vmem:[#allocation8 + $0x160] sm:$0xff]
    %v658 = vld [vmem:[#allocation8 + $0x168] sm:$0xff]
    %v659 = vld [vmem:[#allocation8 + $0x170] sm:$0xff]
    %v660 = vld [vmem:[#allocation8 + $0x178] sm:$0xff]
    %v661 = vld [vmem:[#allocation8 + $0x180] sm:$0xff]
    %v662 = vld [vmem:[#allocation8 + $0x188] sm:$0xff]
    %v663 = vld [vmem:[#allocation8 + $0x190] sm:$0xff]
    %v664 = vld [vmem:[#allocation8 + $0x198] sm:$0xff]
    %v665 = vld [vmem:[#allocation8 + $0x1a0] sm:$0xff]
    %v666 = vld [vmem:[#allocation8 + $0x1a8] sm:$0xff]
    %v667 = vld [vmem:[#allocation8 + $0x1b0] sm:$0xff]
    %v668 = vld [vmem:[#allocation8 + $0x1b8] sm:$0xff]
    %v669 = vld [vmem:[#allocation8 + $0x1c0] sm:$0xff]
    %v670 = vld [vmem:[#allocation8 + $0x1c8] sm:$0xff]
    %v671 = vld [vmem:[#allocation8 + $0x1d0] sm:$0xff]
    %v672 = vld [vmem:[#allocation8 + $0x1d8] sm:$0xff]
    %v673 = vld [vmem:[#allocation8 + $0x1e0] sm:$0xff]
    %v674 = vld [vmem:[#allocation8 + $0x1e8] sm:$0xff]
    %v675 = vld [vmem:[#allocation8 + $0x1f0] sm:$0xff]
    %v676 = vld [vmem:[#allocation8 + $0x1f8] sm:$0xff]
    %v677 = vld [vmem:[#allocation8 + $0x200] sm:$0xff]
    %v678 = vld [vmem:[#allocation8 + $0x208] sm:$0xff]
    %v679 = vld [vmem:[#allocation8 + $0x210] sm:$0xff]
    %v680 = vld [vmem:[#allocation8 + $0x218] sm:$0xff]
    %v681 = vld [vmem:[#allocation8 + $0x220] sm:$0xff]
    %v682 = vld [vmem:[#allocation8 + $0x228] sm:$0xff]
    %v683 = vld [vmem:[#allocation8 + $0x230] sm:$0xff]
    %v684 = vld [vmem:[#allocation8 + $0x238] sm:$0xff]
    %v685 = vld [vmem:[#allocation8 + $0x240] sm:$0xff]
    %v686 = vld [vmem:[#allocation8 + $0x248] sm:$0xff]
    %v687 = vld [vmem:[#allocation8 + $0x250] sm:$0xff]
    %v688 = vld [vmem:[#allocation8 + $0x258] sm:$0xff]
    %v689 = vld [vmem:[#allocation8 + $0x260] sm:$0xff]
    %v690 = vld [vmem:[#allocation8 + $0x268] sm:$0xff]
    %v691 = vld [vmem:[#allocation8 + $0x270] sm:$0xff]
    %v692 = vld [vmem:[#allocation8 + $0x278] sm:$0xff]
    %v693 = vld [vmem:[#allocation8 + $0x280] sm:$0xff]
    %v694 = vld [vmem:[#allocation8 + $0x288] sm:$0xff]
    %v695 = vld [vmem:[#allocation8 + $0x290] sm:$0xff]
    %v696 = vld [vmem:[#allocation8 + $0x298] sm:$0xff]
    %v697 = vld [vmem:[#allocation8 + $0x2a0] sm:$0xff]
    %v698 = vld [vmem:[#allocation8 + $0x2a8] sm:$0xff]
    %v699 = vld [vmem:[#allocation8 + $0x2b0] sm:$0xff]
    %v700 = vld [vmem:[#allocation8 + $0x2b8] sm:$0xff]
    %v701 = vld [vmem:[#allocation8 + $0x2c0] sm:$0xff]
    %v702 = vld [vmem:[#allocation8 + $0x2c8] sm:$0xff]
    %v703 = vld [vmem:[#allocation8 + $0x2d0] sm:$0xff]
    %v704 = vld [vmem:[#allocation8 + $0x2d8] sm:$0xff]
    %v705 = vld [vmem:[#allocation8 + $0x2e0] sm:$0xff]
    %v706 = vld [vmem:[#allocation8 + $0x2e8] sm:$0xff]
    %v707 = vld [vmem:[#allocation8 + $0x2f0] sm:$0xff]
    %v708 = vld [vmem:[#allocation8 + $0x2f8] sm:$0xff]
    %v709 = vld [vmem:[#allocation8 + $0x300] sm:$0xff]
    %v710 = vld [vmem:[#allocation8 + $0x308] sm:$0xff]
    %v711 = vld [vmem:[#allocation8 + $0x310] sm:$0xff]
    %v712 = vld [vmem:[#allocation8 + $0x318] sm:$0xff]
    %v713 = vld [vmem:[#allocation8 + $0x320] sm:$0xff]
    %v714 = vld [vmem:[#allocation8 + $0x328] sm:$0xff]
    %v715 = vld [vmem:[#allocation8 + $0x330] sm:$0xff]
    %v716 = vld [vmem:[#allocation8 + $0x338] sm:$0xff]
    %v717 = vld [vmem:[#allocation8 + $0x340] sm:$0xff]
    %v718 = vld [vmem:[#allocation8 + $0x348] sm:$0xff]
    %v719 = vld [vmem:[#allocation8 + $0x350] sm:$0xff]
    %v720 = vld [vmem:[#allocation8 + $0x358] sm:$0xff]
    %v721 = vld [vmem:[#allocation8 + $0x360] sm:$0xff]
    %v722 = vld [vmem:[#allocation8 + $0x368] sm:$0xff]
    %v723 = vld [vmem:[#allocation8 + $0x370] sm:$0xff]
    %v724 = vld [vmem:[#allocation8 + $0x378] sm:$0xff]
    %v725 = vld [vmem:[#allocation8 + $0x380] sm:$0xff]
    %v726 = vld [vmem:[#allocation8 + $0x388] sm:$0xff]
    %v727 = vld [vmem:[#allocation8 + $0x390] sm:$0xff]
    %v728 = vld [vmem:[#allocation8 + $0x398] sm:$0xff]
    %v729 = vld [vmem:[#allocation8 + $0x3a0] sm:$0xff]
    %v730 = vld [vmem:[#allocation8 + $0x3a8] sm:$0xff]
    %v731 = vld [vmem:[#allocation8 + $0x3b0] sm:$0xff]
    %v732 = vld [vmem:[#allocation8 + $0x3b8] sm:$0xff]
    %v733 = vld [vmem:[#allocation8 + $0x3c0] sm:$0xff]
    %v734 = vld [vmem:[#allocation8 + $0x3c8] sm:$0xff]
    %v735 = vld [vmem:[#allocation8 + $0x3d0] sm:$0xff]
    %v736 = vld [vmem:[#allocation8 + $0x3d8] sm:$0xff]
    %v737 = vld [vmem:[#allocation8 + $0x3e0] sm:$0xff]
    %v738 = vld [vmem:[#allocation8 + $0x3e8] sm:$0xff]
    %v739 = vld [vmem:[#allocation8 + $0x3f0] sm:$0xff]
    %v740 = vld [vmem:[#allocation8 + $0x3f8] sm:$0xff]
    %v741 = vld [vmem:[#allocation8 + $0x400] sm:$0xff]
    %v742 = vld [vmem:[#allocation8 + $0x408] sm:$0xff]
    %v743 = vld [vmem:[#allocation8 + $0x410] sm:$0xff]
    %v744 = vld [vmem:[#allocation8 + $0x418] sm:$0xff]
    %v745 = vld [vmem:[#allocation8 + $0x420] sm:$0xff]
    %v746 = vld [vmem:[#allocation8 + $0x428] sm:$0xff]
    %v747 = vld [vmem:[#allocation8 + $0x430] sm:$0xff]
    %v748 = vld [vmem:[#allocation8 + $0x438] sm:$0xff]
    %v749 = vld [vmem:[#allocation8 + $0x440] sm:$0xff]
    %v750 = vld [vmem:[#allocation8 + $0x448] sm:$0xff]
    %v751 = vld [vmem:[#allocation8 + $0x450] sm:$0xff]
    %v752 = vld [vmem:[#allocation8 + $0x458] sm:$0xff]
    %v753 = vld [vmem:[#allocation8 + $0x460] sm:$0xff]
    %v754 = vld [vmem:[#allocation8 + $0x468] sm:$0xff]
    %v755 = vld [vmem:[#allocation8 + $0x470] sm:$0xff]
    %v756 = vld [vmem:[#allocation8 + $0x478] sm:$0xff]
    %v757 = vld [vmem:[#allocation8 + $0x480] sm:$0xff]
    %v758 = vld [vmem:[#allocation8 + $0x488] sm:$0xff]
    %v759 = vld [vmem:[#allocation8 + $0x490] sm:$0xff]
    %v760 = vld [vmem:[#allocation8 + $0x498] sm:$0xff]
    %v761 = vld [vmem:[#allocation8 + $0x4a0] sm:$0xff]
    %v762 = vld [vmem:[#allocation8 + $0x4a8] sm:$0xff]
    %v763 = vld [vmem:[#allocation8 + $0x4b0] sm:$0xff]
    %v764 = vld [vmem:[#allocation8 + $0x4b8] sm:$0xff]
    %v765 = vld [vmem:[#allocation8 + $0x4c0] sm:$0xff]
    %v766 = vld [vmem:[#allocation8 + $0x4c8] sm:$0xff]
    %v767 = vld [vmem:[#allocation8 + $0x4d0] sm:$0xff]
    %v768 = vld [vmem:[#allocation8 + $0x4d8] sm:$0xff]
    %v769 = vld [vmem:[#allocation8 + $0x4e0] sm:$0xff]
    %v770 = vld [vmem:[#allocation8 + $0x4e8] sm:$0xff]
    %v771 = vld [vmem:[#allocation8 + $0x4f0] sm:$0xff]
    %v772 = vld [vmem:[#allocation8 + $0x4f8] sm:$0xff]
    %v773 = vld [vmem:[#allocation8 + $0x500] sm:$0xff]
    %v774 = vld [vmem:[#allocation8 + $0x508] sm:$0xff]
    %v775 = vld [vmem:[#allocation8 + $0x510] sm:$0xff]
    %v776 = vld [vmem:[#allocation8 + $0x518] sm:$0xff]
    %v777 = vld [vmem:[#allocation8 + $0x520] sm:$0xff]
    %v778 = vld [vmem:[#allocation8 + $0x528] sm:$0xff]
    %v779 = vld [vmem:[#allocation8 + $0x530] sm:$0xff]
    %v780 = vld [vmem:[#allocation8 + $0x538] sm:$0xff]
    %v781 = vld [vmem:[#allocation8 + $0x540] sm:$0xff]
    %v782 = vld [vmem:[#allocation8 + $0x548] sm:$0xff]
    %v783 = vld [vmem:[#allocation8 + $0x550] sm:$0xff]
    %v784 = vld [vmem:[#allocation8 + $0x558] sm:$0xff]
    %v785 = vld [vmem:[#allocation8 + $0x560] sm:$0xff]
    %v786 = vld [vmem:[#allocation8 + $0x568] sm:$0xff]
    %v787 = vld [vmem:[#allocation8 + $0x570] sm:$0xff]
    %v788 = vld [vmem:[#allocation8 + $0x578] sm:$0xff]
    %v789 = vld [vmem:[#allocation8 + $0x580] sm:$0xff]
    %v790 = vld [vmem:[#allocation8 + $0x588] sm:$0xff]
    %v791 = vld [vmem:[#allocation8 + $0x590] sm:$0xff]
    %v792 = vld [vmem:[#allocation8 + $0x598] sm:$0xff]
    %v793 = vld [vmem:[#allocation8 + $0x5a0] sm:$0xff]
    %v794 = vld [vmem:[#allocation8 + $0x5a8] sm:$0xff]
    %v795 = vld [vmem:[#allocation8 + $0x5b0] sm:$0xff]
    %v796 = vld [vmem:[#allocation8 + $0x5b8] sm:$0xff]
    %v797 = vld [vmem:[#allocation8 + $0x5c0] sm:$0xff]
    %v798 = vld [vmem:[#allocation8 + $0x5c8] sm:$0xff]
    %v799 = vld [vmem:[#allocation8 + $0x5d0] sm:$0xff]
    %v800 = vld [vmem:[#allocation8 + $0x5d8] sm:$0xff]
    %v801 = vld [vmem:[#allocation8 + $0x5e0] sm:$0xff]
    %v802 = vld [vmem:[#allocation8 + $0x5e8] sm:$0xff]
    %v803 = vld [vmem:[#allocation8 + $0x5f0] sm:$0xff]
    %v804 = vld [vmem:[#allocation8 + $0x5f8] sm:$0xff]
    %v805 = vld [vmem:[#allocation8 + $0x600] sm:$0xff]
    %v806 = vld [vmem:[#allocation8 + $0x608] sm:$0xff]
    %v807 = vld [vmem:[#allocation8 + $0x610] sm:$0xff]
    %v808 = vld [vmem:[#allocation8 + $0x618] sm:$0xff]
    %v809 = vld [vmem:[#allocation8 + $0x620] sm:$0xff]
    %v810 = vld [vmem:[#allocation8 + $0x628] sm:$0xff]
    %v811 = vld [vmem:[#allocation8 + $0x630] sm:$0xff]
    %v812 = vld [vmem:[#allocation8 + $0x638] sm:$0xff]
    %v813 = vld [vmem:[#allocation8 + $0x640] sm:$0xff]
    %v814 = vld [vmem:[#allocation8 + $0x648] sm:$0xff]
    %v815 = vld [vmem:[#allocation8 + $0x650] sm:$0xff]
    %v816 = vld [vmem:[#allocation8 + $0x658] sm:$0xff]
    %v817 = vld [vmem:[#allocation8 + $0x660] sm:$0xff]
    %v818 = vld [vmem:[#allocation8 + $0x668] sm:$0xff]
    %v819 = vld [vmem:[#allocation8 + $0x670] sm:$0xff]
    %v820 = vld [vmem:[#allocation8 + $0x678] sm:$0xff]
    %v821 = vld [vmem:[#allocation8 + $0x680] sm:$0xff]
    %v822 = vld [vmem:[#allocation8 + $0x688] sm:$0xff]
    %v823 = vld [vmem:[#allocation8 + $0x690] sm:$0xff]
    %v824 = vld [vmem:[#allocation8 + $0x698] sm:$0xff]
    %v825 = vld [vmem:[#allocation8 + $0x6a0] sm:$0xff]
    %v826 = vld [vmem:[#allocation8 + $0x6a8] sm:$0xff]
    %v827 = vld [vmem:[#allocation8 + $0x6b0] sm:$0xff]
    %v828 = vld [vmem:[#allocation8 + $0x6b8] sm:$0xff]
    %v829 = vld [vmem:[#allocation8 + $0x6c0] sm:$0xff]
    %v830 = vld [vmem:[#allocation8 + $0x6c8] sm:$0xff]
    %v831 = vld [vmem:[#allocation8 + $0x6d0] sm:$0xff]
    %v832 = vld [vmem:[#allocation8 + $0x6d8] sm:$0xff]
    %v833 = vld [vmem:[#allocation8 + $0x6e0] sm:$0xff]
    %v834 = vld [vmem:[#allocation8 + $0x6e8] sm:$0xff]
    %v835 = vld [vmem:[#allocation8 + $0x6f0] sm:$0xff]
    %v836 = vld [vmem:[#allocation8 + $0x6f8] sm:$0xff]
    %v837 = vld [vmem:[#allocation10] sm:$0xf]
    %v839 = vperm.slane %v837, 0
    %v840 = vperm.slane %v837, 1
    %v841 = vperm.slane %v837, 2
    %v842 = vperm.slane %v837, 3
    %v1071 = vunpack.c.l.b16 %v613
    %v1072 = vunpack.c.h.b16 %v613
    %v1073 = vunpack.c.l.b16 %v614
    %v1074 = vunpack.c.h.b16 %v614
    %v1075 = vunpack.c.l.b16 %v615
    %v1076 = vunpack.c.h.b16 %v615
    %v1077 = vunpack.c.l.b16 %v616
    %v1078 = vunpack.c.h.b16 %v616
    %v1079 = vunpack.c.l.b16 %v617
    %v1080 = vunpack.c.h.b16 %v617
    %v1081 = vunpack.c.l.b16 %v618
    %v1082 = vunpack.c.h.b16 %v618
    %v1083 = vunpack.c.l.b16 %v619
    %v1084 = vunpack.c.h.b16 %v619
    %v1085 = vunpack.c.l.b16 %v620
    %v1086 = vunpack.c.h.b16 %v620
    %v1087 = vunpack.c.l.b16 %v621
    %v1088 = vunpack.c.h.b16 %v621
    %v1089 = vunpack.c.l.b16 %v622
    %v1090 = vunpack.c.h.b16 %v622
    %v1091 = vunpack.c.l.b16 %v623
    %v1092 = vunpack.c.h.b16 %v623
    %v1093 = vunpack.c.l.b16 %v624
    %v1094 = vunpack.c.h.b16 %v624
    %v1095 = vunpack.c.l.b16 %v625
    %v1096 = vunpack.c.h.b16 %v625
    %v1097 = vunpack.c.l.b16 %v626
    %v1098 = vunpack.c.h.b16 %v626
    %v1099 = vunpack.c.l.b16 %v627
    %v1100 = vunpack.c.h.b16 %v627
    %v1101 = vunpack.c.l.b16 %v628
    %v1102 = vunpack.c.h.b16 %v628
    %v1103 = vunpack.c.l.b16 %v629
    %v1104 = vunpack.c.h.b16 %v629
    %v1105 = vunpack.c.l.b16 %v630
    %v1106 = vunpack.c.h.b16 %v630
    %v1107 = vunpack.c.l.b16 %v631
    %v1108 = vunpack.c.h.b16 %v631
    %v1109 = vunpack.c.l.b16 %v632
    %v1110 = vunpack.c.h.b16 %v632
    %v1111 = vunpack.c.l.b16 %v633
    %v1112 = vunpack.c.h.b16 %v633
    %v1113 = vunpack.c.l.b16 %v634
    %v1114 = vunpack.c.h.b16 %v634
    %v1115 = vunpack.c.l.b16 %v635
    %v1116 = vunpack.c.h.b16 %v635
    %v1117 = vunpack.c.l.b16 %v636
    %v1118 = vunpack.c.h.b16 %v636
    %v1119 = vunpack.c.l.b16 %v637
    %v1120 = vunpack.c.h.b16 %v637
    %v1121 = vunpack.c.l.b16 %v638
    %v1122 = vunpack.c.h.b16 %v638
    %v1123 = vunpack.c.l.b16 %v639
    %v1124 = vunpack.c.h.b16 %v639
    %v1125 = vunpack.c.l.b16 %v640
    %v1126 = vunpack.c.h.b16 %v640
    %v1127 = vunpack.c.l.b16 %v641
    %v1128 = vunpack.c.h.b16 %v641
    %v1129 = vunpack.c.l.b16 %v642
    %v1130 = vunpack.c.h.b16 %v642
    %v1131 = vunpack.c.l.b16 %v643
    %v1132 = vunpack.c.h.b16 %v643
    %v1133 = vunpack.c.l.b16 %v644
    %v1134 = vunpack.c.h.b16 %v644
    %v1135 = vunpack.c.l.b16 %v645
    %v1136 = vunpack.c.h.b16 %v645
    %v1137 = vunpack.c.l.b16 %v646
    %v1138 = vunpack.c.h.b16 %v646
    %v1139 = vunpack.c.l.b16 %v647
    %v1140 = vunpack.c.h.b16 %v647
    %v1141 = vunpack.c.l.b16 %v648
    %v1142 = vunpack.c.h.b16 %v648
    %v1143 = vunpack.c.l.b16 %v649
    %v1144 = vunpack.c.h.b16 %v649
    %v1145 = vunpack.c.l.b16 %v650
    %v1146 = vunpack.c.h.b16 %v650
    %v1147 = vunpack.c.l.b16 %v651
    %v1148 = vunpack.c.h.b16 %v651
    %v1149 = vunpack.c.l.b16 %v652
    %v1150 = vunpack.c.h.b16 %v652
    %v1151 = vunpack.c.l.b16 %v653
    %v1152 = vunpack.c.h.b16 %v653
    %v1153 = vunpack.c.l.b16 %v654
    %v1154 = vunpack.c.h.b16 %v654
    %v1155 = vunpack.c.l.b16 %v655
    %v1156 = vunpack.c.h.b16 %v655
    %v1157 = vunpack.c.l.b16 %v656
    %v1158 = vunpack.c.h.b16 %v656
    %v1159 = vunpack.c.l.b16 %v657
    %v1160 = vunpack.c.h.b16 %v657
    %v1161 = vunpack.c.l.b16 %v658
    %v1162 = vunpack.c.h.b16 %v658
    %v1163 = vunpack.c.l.b16 %v659
    %v1164 = vunpack.c.h.b16 %v659
    %v1165 = vunpack.c.l.b16 %v660
    %v1166 = vunpack.c.h.b16 %v660
    %v1167 = vunpack.c.l.b16 %v661
    %v1168 = vunpack.c.h.b16 %v661
    %v1169 = vunpack.c.l.b16 %v662
    %v1170 = vunpack.c.h.b16 %v662
    %v1171 = vunpack.c.l.b16 %v663
    %v1172 = vunpack.c.h.b16 %v663
    %v1173 = vunpack.c.l.b16 %v664
    %v1174 = vunpack.c.h.b16 %v664
    %v1175 = vunpack.c.l.b16 %v665
    %v1176 = vunpack.c.h.b16 %v665
    %v1177 = vunpack.c.l.b16 %v666
    %v1178 = vunpack.c.h.b16 %v666
    %v1179 = vunpack.c.l.b16 %v667
    %v1180 = vunpack.c.h.b16 %v667
    %v1181 = vunpack.c.l.b16 %v668
    %v1182 = vunpack.c.h.b16 %v668
    %v1183 = vunpack.c.l.b16 %v669
    %v1184 = vunpack.c.h.b16 %v669
    %v1185 = vunpack.c.l.b16 %v670
    %v1186 = vunpack.c.h.b16 %v670
    %v1187 = vunpack.c.l.b16 %v671
    %v1188 = vunpack.c.h.b16 %v671
    %v1189 = vunpack.c.l.b16 %v672
    %v1190 = vunpack.c.h.b16 %v672
    %v1191 = vunpack.c.l.b16 %v673
    %v1192 = vunpack.c.h.b16 %v673
    %v1193 = vunpack.c.l.b16 %v674
    %v1194 = vunpack.c.h.b16 %v674
    %v1195 = vunpack.c.l.b16 %v675
    %v1196 = vunpack.c.h.b16 %v675
    %v1197 = vunpack.c.l.b16 %v676
    %v1198 = vunpack.c.h.b16 %v676
    %v1199 = vunpack.c.l.b16 %v677
    %v1200 = vunpack.c.h.b16 %v677
    %v1201 = vunpack.c.l.b16 %v678
    %v1202 = vunpack.c.h.b16 %v678
    %v1203 = vunpack.c.l.b16 %v679
    %v1204 = vunpack.c.h.b16 %v679
    %v1205 = vunpack.c.l.b16 %v680
    %v1206 = vunpack.c.h.b16 %v680
    %v1207 = vunpack.c.l.b16 %v681
    %v1208 = vunpack.c.h.b16 %v681
    %v1209 = vunpack.c.l.b16 %v682
    %v1210 = vunpack.c.h.b16 %v682
    %v1211 = vunpack.c.l.b16 %v683
    %v1212 = vunpack.c.h.b16 %v683
    %v1213 = vunpack.c.l.b16 %v684
    %v1214 = vunpack.c.h.b16 %v684
    %v1215 = vunpack.c.l.b16 %v685
    %v1216 = vunpack.c.h.b16 %v685
    %v1217 = vunpack.c.l.b16 %v686
    %v1218 = vunpack.c.h.b16 %v686
    %v1219 = vunpack.c.l.b16 %v687
    %v1220 = vunpack.c.h.b16 %v687
    %v1221 = vunpack.c.l.b16 %v688
    %v1222 = vunpack.c.h.b16 %v688
    %v1223 = vunpack.c.l.b16 %v689
    %v1224 = vunpack.c.h.b16 %v689
    %v1225 = vunpack.c.l.b16 %v690
    %v1226 = vunpack.c.h.b16 %v690
    %v1227 = vunpack.c.l.b16 %v691
    %v1228 = vunpack.c.h.b16 %v691
    %v1229 = vunpack.c.l.b16 %v692
    %v1230 = vunpack.c.h.b16 %v692
    %v1231 = vunpack.c.l.b16 %v693
    %v1232 = vunpack.c.h.b16 %v693
    %v1233 = vunpack.c.l.b16 %v694
    %v1234 = vunpack.c.h.b16 %v694
    %v1235 = vunpack.c.l.b16 %v695
    %v1236 = vunpack.c.h.b16 %v695
    %v1237 = vunpack.c.l.b16 %v696
    %v1238 = vunpack.c.h.b16 %v696
    %v1239 = vunpack.c.l.b16 %v697
    %v1240 = vunpack.c.h.b16 %v697
    %v1241 = vunpack.c.l.b16 %v698
    %v1242 = vunpack.c.h.b16 %v698
    %v1243 = vunpack.c.l.b16 %v699
    %v1244 = vunpack.c.h.b16 %v699
    %v1245 = vunpack.c.l.b16 %v700
    %v1246 = vunpack.c.h.b16 %v700
    %v1247 = vunpack.c.l.b16 %v701
    %v1248 = vunpack.c.h.b16 %v701
    %v1249 = vunpack.c.l.b16 %v702
    %v1250 = vunpack.c.h.b16 %v702
    %v1251 = vunpack.c.l.b16 %v703
    %v1252 = vunpack.c.h.b16 %v703
    %v1253 = vunpack.c.l.b16 %v704
    %v1254 = vunpack.c.h.b16 %v704
    %v1255 = vunpack.c.l.b16 %v705
    %v1256 = vunpack.c.h.b16 %v705
    %v1257 = vunpack.c.l.b16 %v706
    %v1258 = vunpack.c.h.b16 %v706
    %v1259 = vunpack.c.l.b16 %v707
    %v1260 = vunpack.c.h.b16 %v707
    %v1261 = vunpack.c.l.b16 %v708
    %v1262 = vunpack.c.h.b16 %v708
    %v1263 = vunpack.c.l.b16 %v709
    %v1264 = vunpack.c.h.b16 %v709
    %v1265 = vunpack.c.l.b16 %v710
    %v1266 = vunpack.c.h.b16 %v710
    %v1267 = vunpack.c.l.b16 %v711
    %v1268 = vunpack.c.h.b16 %v711
    %v1269 = vunpack.c.l.b16 %v712
    %v1270 = vunpack.c.h.b16 %v712
    %v1271 = vunpack.c.l.b16 %v713
    %v1272 = vunpack.c.h.b16 %v713
    %v1273 = vunpack.c.l.b16 %v714
    %v1274 = vunpack.c.h.b16 %v714
    %v1275 = vunpack.c.l.b16 %v715
    %v1276 = vunpack.c.h.b16 %v715
    %v1277 = vunpack.c.l.b16 %v716
    %v1278 = vunpack.c.h.b16 %v716
    %v1279 = vunpack.c.l.b16 %v717
    %v1280 = vunpack.c.h.b16 %v717
    %v1281 = vunpack.c.l.b16 %v718
    %v1282 = vunpack.c.h.b16 %v718
    %v1283 = vunpack.c.l.b16 %v719
    %v1284 = vunpack.c.h.b16 %v719
    %v1285 = vunpack.c.l.b16 %v720
    %v1286 = vunpack.c.h.b16 %v720
    %v1287 = vunpack.c.l.b16 %v721
    %v1288 = vunpack.c.h.b16 %v721
    %v1289 = vunpack.c.l.b16 %v722
    %v1290 = vunpack.c.h.b16 %v722
    %v1291 = vunpack.c.l.b16 %v723
    %v1292 = vunpack.c.h.b16 %v723
    %v1293 = vunpack.c.l.b16 %v724
    %v1294 = vunpack.c.h.b16 %v724
    %v1295 = vunpack.c.l.b16 %v725
    %v1296 = vunpack.c.h.b16 %v725
    %v1297 = vunpack.c.l.b16 %v726
    %v1298 = vunpack.c.h.b16 %v726
    %v1299 = vunpack.c.l.b16 %v727
    %v1300 = vunpack.c.h.b16 %v727
    %v1301 = vunpack.c.l.b16 %v728
    %v1302 = vunpack.c.h.b16 %v728
    %v1303 = vunpack.c.l.b16 %v729
    %v1304 = vunpack.c.h.b16 %v729
    %v1305 = vunpack.c.l.b16 %v730
    %v1306 = vunpack.c.h.b16 %v730
    %v1307 = vunpack.c.l.b16 %v731
    %v1308 = vunpack.c.h.b16 %v731
    %v1309 = vunpack.c.l.b16 %v732
    %v1310 = vunpack.c.h.b16 %v732
    %v1311 = vunpack.c.l.b16 %v733
    %v1312 = vunpack.c.h.b16 %v733
    %v1313 = vunpack.c.l.b16 %v734
    %v1314 = vunpack.c.h.b16 %v734
    %v1315 = vunpack.c.l.b16 %v735
    %v1316 = vunpack.c.h.b16 %v735
    %v1317 = vunpack.c.l.b16 %v736
    %v1318 = vunpack.c.h.b16 %v736
    %v1319 = vunpack.c.l.b16 %v737
    %v1320 = vunpack.c.h.b16 %v737
    %v1321 = vunpack.c.l.b16 %v738
    %v1322 = vunpack.c.h.b16 %v738
    %v1323 = vunpack.c.l.b16 %v739
    %v1324 = vunpack.c.h.b16 %v739
    %v1325 = vunpack.c.l.b16 %v740
    %v1326 = vunpack.c.h.b16 %v740
    %v1327 = vunpack.c.l.b16 %v741
    %v1328 = vunpack.c.h.b16 %v741
    %v1329 = vunpack.c.l.b16 %v742
    %v1330 = vunpack.c.h.b16 %v742
    %v1331 = vunpack.c.l.b16 %v743
    %v1332 = vunpack.c.h.b16 %v743
    %v1333 = vunpack.c.l.b16 %v744
    %v1334 = vunpack.c.h.b16 %v744
    %v1335 = vunpack.c.l.b16 %v745
    %v1336 = vunpack.c.h.b16 %v745
    %v1337 = vunpack.c.l.b16 %v746
    %v1338 = vunpack.c.h.b16 %v746
    %v1339 = vunpack.c.l.b16 %v747
    %v1340 = vunpack.c.h.b16 %v747
    %v1341 = vunpack.c.l.b16 %v748
    %v1342 = vunpack.c.h.b16 %v748
    %v1343 = vunpack.c.l.b16 %v749
    %v1344 = vunpack.c.h.b16 %v749
    %v1345 = vunpack.c.l.b16 %v750
    %v1346 = vunpack.c.h.b16 %v750
    %v1347 = vunpack.c.l.b16 %v751
    %v1348 = vunpack.c.h.b16 %v751
    %v1349 = vunpack.c.l.b16 %v752
    %v1350 = vunpack.c.h.b16 %v752
    %v1351 = vunpack.c.l.b16 %v753
    %v1352 = vunpack.c.h.b16 %v753
    %v1353 = vunpack.c.l.b16 %v754
    %v1354 = vunpack.c.h.b16 %v754
    %v1355 = vunpack.c.l.b16 %v755
    %v1356 = vunpack.c.h.b16 %v755
    %v1357 = vunpack.c.l.b16 %v756
    %v1358 = vunpack.c.h.b16 %v756
    %v1359 = vunpack.c.l.b16 %v757
    %v1360 = vunpack.c.h.b16 %v757
    %v1361 = vunpack.c.l.b16 %v758
    %v1362 = vunpack.c.h.b16 %v758
    %v1363 = vunpack.c.l.b16 %v759
    %v1364 = vunpack.c.h.b16 %v759
    %v1365 = vunpack.c.l.b16 %v760
    %v1366 = vunpack.c.h.b16 %v760
    %v1367 = vunpack.c.l.b16 %v761
    %v1368 = vunpack.c.h.b16 %v761
    %v1369 = vunpack.c.l.b16 %v762
    %v1370 = vunpack.c.h.b16 %v762
    %v1371 = vunpack.c.l.b16 %v763
    %v1372 = vunpack.c.h.b16 %v763
    %v1373 = vunpack.c.l.b16 %v764
    %v1374 = vunpack.c.h.b16 %v764
    %v1375 = vunpack.c.l.b16 %v765
    %v1376 = vunpack.c.h.b16 %v765
    %v1377 = vunpack.c.l.b16 %v766
    %v1378 = vunpack.c.h.b16 %v766
    %v1379 = vunpack.c.l.b16 %v767
    %v1380 = vunpack.c.h.b16 %v767
    %v1381 = vunpack.c.l.b16 %v768
    %v1382 = vunpack.c.h.b16 %v768
    %v1383 = vunpack.c.l.b16 %v769
    %v1384 = vunpack.c.h.b16 %v769
    %v1385 = vunpack.c.l.b16 %v770
    %v1386 = vunpack.c.h.b16 %v770
    %v1387 = vunpack.c.l.b16 %v771
    %v1388 = vunpack.c.h.b16 %v771
    %v1389 = vunpack.c.l.b16 %v772
    %v1390 = vunpack.c.h.b16 %v772
    %v1391 = vunpack.c.l.b16 %v773
    %v1392 = vunpack.c.h.b16 %v773
    %v1393 = vunpack.c.l.b16 %v774
    %v1394 = vunpack.c.h.b16 %v774
    %v1395 = vunpack.c.l.b16 %v775
    %v1396 = vunpack.c.h.b16 %v775
    %v1397 = vunpack.c.l.b16 %v776
    %v1398 = vunpack.c.h.b16 %v776
    %v1399 = vunpack.c.l.b16 %v777
    %v1400 = vunpack.c.h.b16 %v777
    %v1401 = vunpack.c.l.b16 %v778
    %v1402 = vunpack.c.h.b16 %v778
    %v1403 = vunpack.c.l.b16 %v779
    %v1404 = vunpack.c.h.b16 %v779
    %v1405 = vunpack.c.l.b16 %v780
    %v1406 = vunpack.c.h.b16 %v780
    %v1407 = vunpack.c.l.b16 %v781
    %v1408 = vunpack.c.h.b16 %v781
    %v1409 = vunpack.c.l.b16 %v782
    %v1410 = vunpack.c.h.b16 %v782
    %v1411 = vunpack.c.l.b16 %v783
    %v1412 = vunpack.c.h.b16 %v783
    %v1413 = vunpack.c.l.b16 %v784
    %v1414 = vunpack.c.h.b16 %v784
    %v1415 = vunpack.c.l.b16 %v785
    %v1416 = vunpack.c.h.b16 %v785
    %v1417 = vunpack.c.l.b16 %v786
    %v1418 = vunpack.c.h.b16 %v786
    %v1419 = vunpack.c.l.b16 %v787
    %v1420 = vunpack.c.h.b16 %v787
    %v1421 = vunpack.c.l.b16 %v788
    %v1422 = vunpack.c.h.b16 %v788
    %v1423 = vunpack.c.l.b16 %v789
    %v1424 = vunpack.c.h.b16 %v789
    %v1425 = vunpack.c.l.b16 %v790
    %v1426 = vunpack.c.h.b16 %v790
    %v1427 = vunpack.c.l.b16 %v791
    %v1428 = vunpack.c.h.b16 %v791
    %v1429 = vunpack.c.l.b16 %v792
    %v1430 = vunpack.c.h.b16 %v792
    %v1431 = vunpack.c.l.b16 %v793
    %v1432 = vunpack.c.h.b16 %v793
    %v1433 = vunpack.c.l.b16 %v794
    %v1434 = vunpack.c.h.b16 %v794
    %v1435 = vunpack.c.l.b16 %v795
    %v1436 = vunpack.c.h.b16 %v795
    %v1437 = vunpack.c.l.b16 %v796
    %v1438 = vunpack.c.h.b16 %v796
    %v1439 = vunpack.c.l.b16 %v797
    %v1440 = vunpack.c.h.b16 %v797
    %v1441 = vunpack.c.l.b16 %v798
    %v1442 = vunpack.c.h.b16 %v798
    %v1443 = vunpack.c.l.b16 %v799
    %v1444 = vunpack.c.h.b16 %v799
    %v1445 = vunpack.c.l.b16 %v800
    %v1446 = vunpack.c.h.b16 %v800
    %v1447 = vunpack.c.l.b16 %v801
    %v1448 = vunpack.c.h.b16 %v801
    %v1449 = vunpack.c.l.b16 %v802
    %v1450 = vunpack.c.h.b16 %v802
    %v1451 = vunpack.c.l.b16 %v803
    %v1452 = vunpack.c.h.b16 %v803
    %v1453 = vunpack.c.l.b16 %v804
    %v1454 = vunpack.c.h.b16 %v804
    %v1455 = vunpack.c.l.b16 %v805
    %v1456 = vunpack.c.h.b16 %v805
    %v1457 = vunpack.c.l.b16 %v806
    %v1458 = vunpack.c.h.b16 %v806
    %v1459 = vunpack.c.l.b16 %v807
    %v1460 = vunpack.c.h.b16 %v807
    %v1461 = vunpack.c.l.b16 %v808
    %v1462 = vunpack.c.h.b16 %v808
    %v1463 = vunpack.c.l.b16 %v809
    %v1464 = vunpack.c.h.b16 %v809
    %v1465 = vunpack.c.l.b16 %v810
    %v1466 = vunpack.c.h.b16 %v810
    %v1467 = vunpack.c.l.b16 %v811
    %v1468 = vunpack.c.h.b16 %v811
    %v1469 = vunpack.c.l.b16 %v812
    %v1470 = vunpack.c.h.b16 %v812
    %v1471 = vunpack.c.l.b16 %v813
    %v1472 = vunpack.c.h.b16 %v813
    %v1473 = vunpack.c.l.b16 %v814
    %v1474 = vunpack.c.h.b16 %v814
    %v1475 = vunpack.c.l.b16 %v815
    %v1476 = vunpack.c.h.b16 %v815
    %v1477 = vunpack.c.l.b16 %v816
    %v1478 = vunpack.c.h.b16 %v816
    %v1479 = vunpack.c.l.b16 %v817
    %v1480 = vunpack.c.h.b16 %v817
    %v1481 = vunpack.c.l.b16 %v818
    %v1482 = vunpack.c.h.b16 %v818
    %v1483 = vunpack.c.l.b16 %v819
    %v1484 = vunpack.c.h.b16 %v819
    %v1485 = vunpack.c.l.b16 %v820
    %v1486 = vunpack.c.h.b16 %v820
    %v1487 = vunpack.c.l.b16 %v821
    %v1488 = vunpack.c.h.b16 %v821
    %v1489 = vunpack.c.l.b16 %v822
    %v1490 = vunpack.c.h.b16 %v822
    %v1491 = vunpack.c.l.b16 %v823
    %v1492 = vunpack.c.h.b16 %v823
    %v1493 = vunpack.c.l.b16 %v824
    %v1494 = vunpack.c.h.b16 %v824
    %v1495 = vunpack.c.l.b16 %v825
    %v1496 = vunpack.c.h.b16 %v825
    %v1497 = vunpack.c.l.b16 %v826
    %v1498 = vunpack.c.h.b16 %v826
    %v1499 = vunpack.c.l.b16 %v827
    %v1500 = vunpack.c.h.b16 %v827
    %v1501 = vunpack.c.l.b16 %v828
    %v1502 = vunpack.c.h.b16 %v828
    %v1503 = vunpack.c.l.b16 %v829
    %v1504 = vunpack.c.h.b16 %v829
    %v1505 = vunpack.c.l.b16 %v830
    %v1506 = vunpack.c.h.b16 %v830
    %v1507 = vunpack.c.l.b16 %v831
    %v1508 = vunpack.c.h.b16 %v831
    %v1509 = vunpack.c.l.b16 %v832
    %v1510 = vunpack.c.h.b16 %v832
    %v1511 = vunpack.c.l.b16 %v833
    %v1512 = vunpack.c.h.b16 %v833
    %v1513 = vunpack.c.l.b16 %v834
    %v1514 = vunpack.c.h.b16 %v834
    %v1515 = vunpack.c.l.b16 %v835
    %v1516 = vunpack.c.h.b16 %v835
    %v1517 = vunpack.c.l.b16 %v836
    %v1518 = vunpack.c.h.b16 %v836
    %v1519 = vpack.c.b16 %v1075, %v1071
    %v1520 = vpack.c.b16 %v1076, %v1072
    %v1521 = vpack.c.b16 %v1077, %v1073
    %v1522 = vpack.c.b16 %v1078, %v1074
    %v1523 = vpack.c.b16 %v1083, %v1079
    %v1524 = vpack.c.b16 %v1084, %v1080
    %v1525 = vpack.c.b16 %v1085, %v1081
    %v1526 = vpack.c.b16 %v1086, %v1082
    %v1527 = vpack.c.b16 %v1091, %v1087
    %v1528 = vpack.c.b16 %v1092, %v1088
    %v1529 = vpack.c.b16 %v1093, %v1089
    %v1530 = vpack.c.b16 %v1094, %v1090
    %v1531 = vpack.c.b16 %v1099, %v1095
    %v1532 = vpack.c.b16 %v1100, %v1096
    %v1533 = vpack.c.b16 %v1101, %v1097
    %v1534 = vpack.c.b16 %v1102, %v1098
    %v1535 = vpack.c.b16 %v1107, %v1103
    %v1536 = vpack.c.b16 %v1108, %v1104
    %v1537 = vpack.c.b16 %v1109, %v1105
    %v1538 = vpack.c.b16 %v1110, %v1106
    %v1539 = vpack.c.b16 %v1115, %v1111
    %v1540 = vpack.c.b16 %v1116, %v1112
    %v1541 = vpack.c.b16 %v1117, %v1113
    %v1542 = vpack.c.b16 %v1118, %v1114
    %v1543 = vpack.c.b16 %v1123, %v1119
    %v1544 = vpack.c.b16 %v1124, %v1120
    %v1545 = vpack.c.b16 %v1125, %v1121
    %v1546 = vpack.c.b16 %v1126, %v1122
    %v1547 = vpack.c.b16 %v1131, %v1127
    %v1548 = vpack.c.b16 %v1132, %v1128
    %v1549 = vpack.c.b16 %v1133, %v1129
    %v1550 = vpack.c.b16 %v1134, %v1130
    %v1551 = vpack.c.b16 %v1139, %v1135
    %v1552 = vpack.c.b16 %v1140, %v1136
    %v1553 = vpack.c.b16 %v1141, %v1137
    %v1554 = vpack.c.b16 %v1142, %v1138
    %v1555 = vpack.c.b16 %v1147, %v1143
    %v1556 = vpack.c.b16 %v1148, %v1144
    %v1557 = vpack.c.b16 %v1149, %v1145
    %v1558 = vpack.c.b16 %v1150, %v1146
    %v1559 = vpack.c.b16 %v1155, %v1151
    %v1560 = vpack.c.b16 %v1156, %v1152
    %v1561 = vpack.c.b16 %v1157, %v1153
    %v1562 = vpack.c.b16 %v1158, %v1154
    %v1563 = vpack.c.b16 %v1163, %v1159
    %v1564 = vpack.c.b16 %v1164, %v1160
    %v1565 = vpack.c.b16 %v1165, %v1161
    %v1566 = vpack.c.b16 %v1166, %v1162
    %v1567 = vpack.c.b16 %v1171, %v1167
    %v1568 = vpack.c.b16 %v1172, %v1168
    %v1569 = vpack.c.b16 %v1173, %v1169
    %v1570 = vpack.c.b16 %v1174, %v1170
    %v1571 = vpack.c.b16 %v1179, %v1175
    %v1572 = vpack.c.b16 %v1180, %v1176
    %v1573 = vpack.c.b16 %v1181, %v1177
    %v1574 = vpack.c.b16 %v1182, %v1178
    %v1575 = vpack.c.b16 %v1187, %v1183
    %v1576 = vpack.c.b16 %v1188, %v1184
    %v1577 = vpack.c.b16 %v1189, %v1185
    %v1578 = vpack.c.b16 %v1190, %v1186
    %v1579 = vpack.c.b16 %v1195, %v1191
    %v1580 = vpack.c.b16 %v1196, %v1192
    %v1581 = vpack.c.b16 %v1197, %v1193
    %v1582 = vpack.c.b16 %v1198, %v1194
    %v1583 = vpack.c.b16 %v1203, %v1199
    %v1584 = vpack.c.b16 %v1204, %v1200
    %v1585 = vpack.c.b16 %v1205, %v1201
    %v1586 = vpack.c.b16 %v1206, %v1202
    %v1587 = vpack.c.b16 %v1211, %v1207
    %v1588 = vpack.c.b16 %v1212, %v1208
    %v1589 = vpack.c.b16 %v1213, %v1209
    %v1590 = vpack.c.b16 %v1214, %v1210
    %v1591 = vpack.c.b16 %v1219, %v1215
    %v1592 = vpack.c.b16 %v1220, %v1216
    %v1593 = vpack.c.b16 %v1221, %v1217
    %v1594 = vpack.c.b16 %v1222, %v1218
    %v1595 = vpack.c.b16 %v1227, %v1223
    %v1596 = vpack.c.b16 %v1228, %v1224
    %v1597 = vpack.c.b16 %v1229, %v1225
    %v1598 = vpack.c.b16 %v1230, %v1226
    %v1599 = vpack.c.b16 %v1235, %v1231
    %v1600 = vpack.c.b16 %v1236, %v1232
    %v1601 = vpack.c.b16 %v1237, %v1233
    %v1602 = vpack.c.b16 %v1238, %v1234
    %v1603 = vpack.c.b16 %v1243, %v1239
    %v1604 = vpack.c.b16 %v1244, %v1240
    %v1605 = vpack.c.b16 %v1245, %v1241
    %v1606 = vpack.c.b16 %v1246, %v1242
    %v1607 = vpack.c.b16 %v1251, %v1247
    %v1608 = vpack.c.b16 %v1252, %v1248
    %v1609 = vpack.c.b16 %v1253, %v1249
    %v1610 = vpack.c.b16 %v1254, %v1250
    %v1611 = vpack.c.b16 %v1259, %v1255
    %v1612 = vpack.c.b16 %v1260, %v1256
    %v1613 = vpack.c.b16 %v1261, %v1257
    %v1614 = vpack.c.b16 %v1262, %v1258
    %v1615 = vpack.c.b16 %v1267, %v1263
    %v1616 = vpack.c.b16 %v1268, %v1264
    %v1617 = vpack.c.b16 %v1269, %v1265
    %v1618 = vpack.c.b16 %v1270, %v1266
    %v1619 = vpack.c.b16 %v1275, %v1271
    %v1620 = vpack.c.b16 %v1276, %v1272
    %v1621 = vpack.c.b16 %v1277, %v1273
    %v1622 = vpack.c.b16 %v1278, %v1274
    %v1623 = vpack.c.b16 %v1283, %v1279
    %v1624 = vpack.c.b16 %v1284, %v1280
    %v1625 = vpack.c.b16 %v1285, %v1281
    %v1626 = vpack.c.b16 %v1286, %v1282
    %v1627 = vpack.c.b16 %v1291, %v1287
    %v1628 = vpack.c.b16 %v1292, %v1288
    %v1629 = vpack.c.b16 %v1293, %v1289
    %v1630 = vpack.c.b16 %v1294, %v1290
    %v1631 = vpack.c.b16 %v1299, %v1295
    %v1632 = vpack.c.b16 %v1300, %v1296
    %v1633 = vpack.c.b16 %v1301, %v1297
    %v1634 = vpack.c.b16 %v1302, %v1298
    %v1635 = vpack.c.b16 %v1307, %v1303
    %v1636 = vpack.c.b16 %v1308, %v1304
    %v1637 = vpack.c.b16 %v1309, %v1305
    %v1638 = vpack.c.b16 %v1310, %v1306
    %v1639 = vpack.c.b16 %v1315, %v1311
    %v1640 = vpack.c.b16 %v1316, %v1312
    %v1641 = vpack.c.b16 %v1317, %v1313
    %v1642 = vpack.c.b16 %v1318, %v1314
    %v1643 = vpack.c.b16 %v1323, %v1319
    %v1644 = vpack.c.b16 %v1324, %v1320
    %v1645 = vpack.c.b16 %v1325, %v1321
    %v1646 = vpack.c.b16 %v1326, %v1322
    %v1647 = vpack.c.b16 %v1331, %v1327
    %v1648 = vpack.c.b16 %v1332, %v1328
    %v1649 = vpack.c.b16 %v1333, %v1329
    %v1650 = vpack.c.b16 %v1334, %v1330
    %v1651 = vpack.c.b16 %v1339, %v1335
    %v1652 = vpack.c.b16 %v1340, %v1336
    %v1653 = vpack.c.b16 %v1341, %v1337
    %v1654 = vpack.c.b16 %v1342, %v1338
    %v1655 = vpack.c.b16 %v1347, %v1343
    %v1656 = vpack.c.b16 %v1348, %v1344
    %v1657 = vpack.c.b16 %v1349, %v1345
    %v1658 = vpack.c.b16 %v1350, %v1346
    %v1659 = vpack.c.b16 %v1355, %v1351
    %v1660 = vpack.c.b16 %v1356, %v1352
    %v1661 = vpack.c.b16 %v1357, %v1353
    %v1662 = vpack.c.b16 %v1358, %v1354
    %v1663 = vpack.c.b16 %v1363, %v1359
    %v1664 = vpack.c.b16 %v1364, %v1360
    %v1665 = vpack.c.b16 %v1365, %v1361
    %v1666 = vpack.c.b16 %v1366, %v1362
    %v1667 = vpack.c.b16 %v1371, %v1367
    %v1668 = vpack.c.b16 %v1372, %v1368
    %v1669 = vpack.c.b16 %v1373, %v1369
    %v1670 = vpack.c.b16 %v1374, %v1370
    %v1671 = vpack.c.b16 %v1379, %v1375
    %v1672 = vpack.c.b16 %v1380, %v1376
    %v1673 = vpack.c.b16 %v1381, %v1377
    %v1674 = vpack.c.b16 %v1382, %v1378
    %v1675 = vpack.c.b16 %v1387, %v1383
    %v1676 = vpack.c.b16 %v1388, %v1384
    %v1677 = vpack.c.b16 %v1389, %v1385
    %v1678 = vpack.c.b16 %v1390, %v1386
    %v1679 = vpack.c.b16 %v1395, %v1391
    %v1680 = vpack.c.b16 %v1396, %v1392
    %v1681 = vpack.c.b16 %v1397, %v1393
    %v1682 = vpack.c.b16 %v1398, %v1394
    %v1683 = vpack.c.b16 %v1403, %v1399
    %v1684 = vpack.c.b16 %v1404, %v1400
    %v1685 = vpack.c.b16 %v1405, %v1401
    %v1686 = vpack.c.b16 %v1406, %v1402
    %v1687 = vpack.c.b16 %v1411, %v1407
    %v1688 = vpack.c.b16 %v1412, %v1408
    %v1689 = vpack.c.b16 %v1413, %v1409
    %v1690 = vpack.c.b16 %v1414, %v1410
    %v1691 = vpack.c.b16 %v1419, %v1415
    %v1692 = vpack.c.b16 %v1420, %v1416
    %v1693 = vpack.c.b16 %v1421, %v1417
    %v1694 = vpack.c.b16 %v1422, %v1418
    %v1695 = vpack.c.b16 %v1427, %v1423
    %v1696 = vpack.c.b16 %v1428, %v1424
    %v1697 = vpack.c.b16 %v1429, %v1425
    %v1698 = vpack.c.b16 %v1430, %v1426
    %v1699 = vpack.c.b16 %v1435, %v1431
    %v1700 = vpack.c.b16 %v1436, %v1432
    %v1701 = vpack.c.b16 %v1437, %v1433
    %v1702 = vpack.c.b16 %v1438, %v1434
    %v1703 = vpack.c.b16 %v1443, %v1439
    %v1704 = vpack.c.b16 %v1444, %v1440
    %v1705 = vpack.c.b16 %v1445, %v1441
    %v1706 = vpack.c.b16 %v1446, %v1442
    %v1707 = vpack.c.b16 %v1451, %v1447
    %v1708 = vpack.c.b16 %v1452, %v1448
    %v1709 = vpack.c.b16 %v1453, %v1449
    %v1710 = vpack.c.b16 %v1454, %v1450
    %v1711 = vpack.c.b16 %v1459, %v1455
    %v1712 = vpack.c.b16 %v1460, %v1456
    %v1713 = vpack.c.b16 %v1461, %v1457
    %v1714 = vpack.c.b16 %v1462, %v1458
    %v1715 = vpack.c.b16 %v1467, %v1463
    %v1716 = vpack.c.b16 %v1468, %v1464
    %v1717 = vpack.c.b16 %v1469, %v1465
    %v1718 = vpack.c.b16 %v1470, %v1466
    %v1719 = vpack.c.b16 %v1475, %v1471
    %v1720 = vpack.c.b16 %v1476, %v1472
    %v1721 = vpack.c.b16 %v1477, %v1473
    %v1722 = vpack.c.b16 %v1478, %v1474
    %v1723 = vpack.c.b16 %v1483, %v1479
    %v1724 = vpack.c.b16 %v1484, %v1480
    %v1725 = vpack.c.b16 %v1485, %v1481
    %v1726 = vpack.c.b16 %v1486, %v1482
    %v1727 = vpack.c.b16 %v1491, %v1487
    %v1728 = vpack.c.b16 %v1492, %v1488
    %v1729 = vpack.c.b16 %v1493, %v1489
    %v1730 = vpack.c.b16 %v1494, %v1490
    %v1731 = vpack.c.b16 %v1499, %v1495
    %v1732 = vpack.c.b16 %v1500, %v1496
    %v1733 = vpack.c.b16 %v1501, %v1497
    %v1734 = vpack.c.b16 %v1502, %v1498
    %v1735 = vpack.c.b16 %v1507, %v1503
    %v1736 = vpack.c.b16 %v1508, %v1504
    %v1737 = vpack.c.b16 %v1509, %v1505
    %v1738 = vpack.c.b16 %v1510, %v1506
    %v1739 = vpack.c.b16 %v1515, %v1511
    %v1740 = vpack.c.b16 %v1516, %v1512
    %v1741 = vpack.c.b16 %v1517, %v1513
    %v1742 = vpack.c.b16 %v1518, %v1514
    %1967 = vmatpush.bf16.msra.mxu0 %v1547
    %1968 = vmatpush.bf16.msra.mxu0 %v1543
    %1969 = vmatpush.bf16.msra.mxu0 %v1539
    %1970 = vmatpush.bf16.msra.mxu0 %v1535
    %1971 = vmatpush.bf16.msra.mxu0 %v1531
    %1972 = vmatpush.bf16.msra.mxu0 %v1527
    %1973 = vmatpush.bf16.msra.mxu0 %v1523
    %1974 = vmatpush.bf16.msra.mxu0 %v1519
    %1975 = vmatmul.bf16.gmra.mxu0 %v606
    %v1976 = vpop.f32.mrf.mxu0
    %v1977 = vadd.f32 %v839, %v1976
    %v1978 = vpop.f32.mrf.mxu0
    %1979 = vdwg.mxu0
    %1980 = vmatpush.bf16.msra.mxu0 %v1579
    %1981 = vmatpush.bf16.msra.mxu0 %v1575
    %1982 = vmatpush.bf16.msra.mxu0 %v1571
    %1983 = vmatpush.bf16.msra.mxu0 %v1567
    %1984 = vmatpush.bf16.msra.mxu0 %v1563
    %1985 = vmatpush.bf16.msra.mxu0 %v1559
    %1986 = vmatpush.bf16.msra.mxu0 %v1555
    %1987 = vmatpush.bf16.msra.mxu0 %v1551
    %1988 = vmatmul.bf16.gmra.mxu0 %v607
    %v1989 = vpop.f32.mrf.mxu0
    %v1990 = vadd.f32 %v1977, %v1989
    %v1991 = vpop.f32.mrf.mxu0
    %1992 = vdwg.mxu0
    %1993 = vmatpush.bf16.msra.mxu0 %v1611
    %1994 = vmatpush.bf16.msra.mxu0 %v1607
    %1995 = vmatpush.bf16.msra.mxu0 %v1603
    %1996 = vmatpush.bf16.msra.mxu0 %v1599
    %1997 = vmatpush.bf16.msra.mxu0 %v1595
    %1998 = vmatpush.bf16.msra.mxu0 %v1591
    %1999 = vmatpush.bf16.msra.mxu0 %v1587
    %2000 = vmatpush.bf16.msra.mxu0 %v1583
    %2001 = vmatmul.bf16.gmra.mxu0 %v608
    %v2002 = vpop.f32.mrf.mxu0
    %v2003 = vadd.f32 %v1990, %v2002
    %v2004 = vpop.f32.mrf.mxu0
    %2005 = vdwg.mxu0
    %2006 = vmatpush.bf16.msra.mxu0 %v1643
    %2007 = vmatpush.bf16.msra.mxu0 %v1639
    %2008 = vmatpush.bf16.msra.mxu0 %v1635
    %2009 = vmatpush.bf16.msra.mxu0 %v1631
    %2010 = vmatpush.bf16.msra.mxu0 %v1627
    %2011 = vmatpush.bf16.msra.mxu0 %v1623
    %2012 = vmatpush.bf16.msra.mxu0 %v1619
    %2013 = vmatpush.bf16.msra.mxu0 %v1615
    %2014 = vmatmul.bf16.gmra.mxu0 %v609
    %v2015 = vpop.f32.mrf.mxu0
    %v2016 = vadd.f32 %v2003, %v2015
    %v2017 = vpop.f32.mrf.mxu0
    %2018 = vdwg.mxu0
    %2019 = vmatpush.bf16.msra.mxu0 %v1675
    %2020 = vmatpush.bf16.msra.mxu0 %v1671
    %2021 = vmatpush.bf16.msra.mxu0 %v1667
    %2022 = vmatpush.bf16.msra.mxu0 %v1663
    %2023 = vmatpush.bf16.msra.mxu0 %v1659
    %2024 = vmatpush.bf16.msra.mxu0 %v1655
    %2025 = vmatpush.bf16.msra.mxu0 %v1651
    %2026 = vmatpush.bf16.msra.mxu0 %v1647
    %2027 = vmatmul.bf16.gmra.mxu0 %v610
    %v2028 = vpop.f32.mrf.mxu0
    %v2029 = vadd.f32 %v2016, %v2028
    %v2030 = vpop.f32.mrf.mxu0
    %2031 = vdwg.mxu0
    %2032 = vmatpush.bf16.msra.mxu0 %v1707
    %2033 = vmatpush.bf16.msra.mxu0 %v1703
    %2034 = vmatpush.bf16.msra.mxu0 %v1699
    %2035 = vmatpush.bf16.msra.mxu0 %v1695
    %2036 = vmatpush.bf16.msra.mxu0 %v1691
    %2037 = vmatpush.bf16.msra.mxu0 %v1687
    %2038 = vmatpush.bf16.msra.mxu0 %v1683
    %2039 = vmatpush.bf16.msra.mxu0 %v1679
    %2040 = vmatmul.bf16.gmra.mxu0 %v611
    %v2041 = vpop.f32.mrf.mxu0
    %v2042 = vadd.f32 %v2029, %v2041
    %v2043 = vpop.f32.mrf.mxu0
    %2044 = vdwg.mxu0
    %2045 = vmatpush.bf16.msra.mxu0 %v1739
    %2046 = vmatpush.bf16.msra.mxu0 %v1735
    %2047 = vmatpush.bf16.msra.mxu0 %v1731
    %2048 = vmatpush.bf16.msra.mxu0 %v1727
    %2049 = vmatpush.bf16.msra.mxu0 %v1723
    %2050 = vmatpush.bf16.msra.mxu0 %v1719
    %2051 = vmatpush.bf16.msra.mxu0 %v1715
    %2052 = vmatpush.bf16.msra.mxu0 %v1711
    %2053 = vmatmul.bf16.gmra.mxu0 %v612
    %v2054 = vpop.f32.mrf.mxu0
    %v2055 = vadd.f32 %v2042, %v2054
    %v2056 = vpop.f32.mrf.mxu0
    %2057 = vdwg.mxu0
    %2058 = vmatpush.bf16.msra.mxu0 %v1548
    %2059 = vmatpush.bf16.msra.mxu0 %v1544
    %2060 = vmatpush.bf16.msra.mxu0 %v1540
    %2061 = vmatpush.bf16.msra.mxu0 %v1536
    %2062 = vmatpush.bf16.msra.mxu0 %v1532
    %2063 = vmatpush.bf16.msra.mxu0 %v1528
    %2064 = vmatpush.bf16.msra.mxu0 %v1524
    %2065 = vmatpush.bf16.msra.mxu0 %v1520
    %2066 = vmatmul.bf16.gmra.mxu0 %v606
    %v2067 = vpop.f32.mrf.mxu0
    %v2068 = vadd.f32 %v840, %v2067
    %v2069 = vpop.f32.mrf.mxu0
    %2070 = vdwg.mxu0
    %2071 = vmatpush.bf16.msra.mxu0 %v1580
    %2072 = vmatpush.bf16.msra.mxu0 %v1576
    %2073 = vmatpush.bf16.msra.mxu0 %v1572
    %2074 = vmatpush.bf16.msra.mxu0 %v1568
    %2075 = vmatpush.bf16.msra.mxu0 %v1564
    %2076 = vmatpush.bf16.msra.mxu0 %v1560
    %2077 = vmatpush.bf16.msra.mxu0 %v1556
    %2078 = vmatpush.bf16.msra.mxu0 %v1552
    %2079 = vmatmul.bf16.gmra.mxu0 %v607
    %v2080 = vpop.f32.mrf.mxu0
    %v2081 = vadd.f32 %v2068, %v2080
    %v2082 = vpop.f32.mrf.mxu0
    %2083 = vdwg.mxu0
    %2084 = vmatpush.bf16.msra.mxu0 %v1612
    %2085 = vmatpush.bf16.msra.mxu0 %v1608
    %2086 = vmatpush.bf16.msra.mxu0 %v1604
    %2087 = vmatpush.bf16.msra.mxu0 %v1600
    %2088 = vmatpush.bf16.msra.mxu0 %v1596
    %2089 = vmatpush.bf16.msra.mxu0 %v1592
    %2090 = vmatpush.bf16.msra.mxu0 %v1588
    %2091 = vmatpush.bf16.msra.mxu0 %v1584
    %2092 = vmatmul.bf16.gmra.mxu0 %v608
    %v2093 = vpop.f32.mrf.mxu0
    %v2094 = vadd.f32 %v2081, %v2093
    %v2095 = vpop.f32.mrf.mxu0
    %2096 = vdwg.mxu0
    %2097 = vmatpush.bf16.msra.mxu0 %v1644
    %2098 = vmatpush.bf16.msra.mxu0 %v1640
    %2099 = vmatpush.bf16.msra.mxu0 %v1636
    %2100 = vmatpush.bf16.msra.mxu0 %v1632
    %2101 = vmatpush.bf16.msra.mxu0 %v1628
    %2102 = vmatpush.bf16.msra.mxu0 %v1624
    %2103 = vmatpush.bf16.msra.mxu0 %v1620
    %2104 = vmatpush.bf16.msra.mxu0 %v1616
    %2105 = vmatmul.bf16.gmra.mxu0 %v609
    %v2106 = vpop.f32.mrf.mxu0
    %v2107 = vadd.f32 %v2094, %v2106
    %v2108 = vpop.f32.mrf.mxu0
    %2109 = vdwg.mxu0
    %2110 = vmatpush.bf16.msra.mxu0 %v1676
    %2111 = vmatpush.bf16.msra.mxu0 %v1672
    %2112 = vmatpush.bf16.msra.mxu0 %v1668
    %2113 = vmatpush.bf16.msra.mxu0 %v1664
    %2114 = vmatpush.bf16.msra.mxu0 %v1660
    %2115 = vmatpush.bf16.msra.mxu0 %v1656
    %2116 = vmatpush.bf16.msra.mxu0 %v1652
    %2117 = vmatpush.bf16.msra.mxu0 %v1648
    %2118 = vmatmul.bf16.gmra.mxu0 %v610
    %v2119 = vpop.f32.mrf.mxu0
    %v2120 = vadd.f32 %v2107, %v2119
    %v2121 = vpop.f32.mrf.mxu0
    %2122 = vdwg.mxu0
    %2123 = vmatpush.bf16.msra.mxu0 %v1708
    %2124 = vmatpush.bf16.msra.mxu0 %v1704
    %2125 = vmatpush.bf16.msra.mxu0 %v1700
    %2126 = vmatpush.bf16.msra.mxu0 %v1696
    %2127 = vmatpush.bf16.msra.mxu0 %v1692
    %2128 = vmatpush.bf16.msra.mxu0 %v1688
    %2129 = vmatpush.bf16.msra.mxu0 %v1684
    %2130 = vmatpush.bf16.msra.mxu0 %v1680
    %2131 = vmatmul.bf16.gmra.mxu0 %v611
    %v2132 = vpop.f32.mrf.mxu0
    %v2133 = vadd.f32 %v2120, %v2132
    %v2134 = vpop.f32.mrf.mxu0
    %2135 = vdwg.mxu0
    %2136 = vmatpush.bf16.msra.mxu0 %v1740
    %2137 = vmatpush.bf16.msra.mxu0 %v1736
    %2138 = vmatpush.bf16.msra.mxu0 %v1732
    %2139 = vmatpush.bf16.msra.mxu0 %v1728
    %2140 = vmatpush.bf16.msra.mxu0 %v1724
    %2141 = vmatpush.bf16.msra.mxu0 %v1720
    %2142 = vmatpush.bf16.msra.mxu0 %v1716
    %2143 = vmatpush.bf16.msra.mxu0 %v1712
    %2144 = vmatmul.bf16.gmra.mxu0 %v612
    %v2145 = vpop.f32.mrf.mxu0
    %v2146 = vadd.f32 %v2133, %v2145
    %v2147 = vpop.f32.mrf.mxu0
    %2148 = vdwg.mxu0
    %2149 = vmatpush.bf16.msra.mxu0 %v1549
    %2150 = vmatpush.bf16.msra.mxu0 %v1545
    %2151 = vmatpush.bf16.msra.mxu0 %v1541
    %2152 = vmatpush.bf16.msra.mxu0 %v1537
    %2153 = vmatpush.bf16.msra.mxu0 %v1533
    %2154 = vmatpush.bf16.msra.mxu0 %v1529
    %2155 = vmatpush.bf16.msra.mxu0 %v1525
    %2156 = vmatpush.bf16.msra.mxu0 %v1521
    %2157 = vmatmul.bf16.gmra.mxu0 %v606
    %v2158 = vpop.f32.mrf.mxu0
    %v2159 = vadd.f32 %v841, %v2158
    %v2160 = vpop.f32.mrf.mxu0
    %2161 = vdwg.mxu0
    %2162 = vmatpush.bf16.msra.mxu0 %v1581
    %2163 = vmatpush.bf16.msra.mxu0 %v1577
    %2164 = vmatpush.bf16.msra.mxu0 %v1573
    %2165 = vmatpush.bf16.msra.mxu0 %v1569
    %2166 = vmatpush.bf16.msra.mxu0 %v1565
    %2167 = vmatpush.bf16.msra.mxu0 %v1561
    %2168 = vmatpush.bf16.msra.mxu0 %v1557
    %2169 = vmatpush.bf16.msra.mxu0 %v1553
    %2170 = vmatmul.bf16.gmra.mxu0 %v607
    %v2171 = vpop.f32.mrf.mxu0
    %v2172 = vadd.f32 %v2159, %v2171
    %v2173 = vpop.f32.mrf.mxu0
    %2174 = vdwg.mxu0
    %2175 = vmatpush.bf16.msra.mxu0 %v1613
    %2176 = vmatpush.bf16.msra.mxu0 %v1609
    %2177 = vmatpush.bf16.msra.mxu0 %v1605
    %2178 = vmatpush.bf16.msra.mxu0 %v1601
    %2179 = vmatpush.bf16.msra.mxu0 %v1597
    %2180 = vmatpush.bf16.msra.mxu0 %v1593
    %2181 = vmatpush.bf16.msra.mxu0 %v1589
    %2182 = vmatpush.bf16.msra.mxu0 %v1585
    %2183 = vmatmul.bf16.gmra.mxu0 %v608
    %v2184 = vpop.f32.mrf.mxu0
    %v2185 = vadd.f32 %v2172, %v2184
    %v2186 = vpop.f32.mrf.mxu0
    %2187 = vdwg.mxu0
    %2188 = vmatpush.bf16.msra.mxu0 %v1645
    %2189 = vmatpush.bf16.msra.mxu0 %v1641
    %2190 = vmatpush.bf16.msra.mxu0 %v1637
    %2191 = vmatpush.bf16.msra.mxu0 %v1633
    %2192 = vmatpush.bf16.msra.mxu0 %v1629
    %2193 = vmatpush.bf16.msra.mxu0 %v1625
    %2194 = vmatpush.bf16.msra.mxu0 %v1621
    %2195 = vmatpush.bf16.msra.mxu0 %v1617
    %2196 = vmatmul.bf16.gmra.mxu0 %v609
    %v2197 = vpop.f32.mrf.mxu0
    %v2198 = vadd.f32 %v2185, %v2197
    %v2199 = vpop.f32.mrf.mxu0
    %2200 = vdwg.mxu0
    %2201 = vmatpush.bf16.msra.mxu0 %v1677
    %2202 = vmatpush.bf16.msra.mxu0 %v1673
    %2203 = vmatpush.bf16.msra.mxu0 %v1669
    %2204 = vmatpush.bf16.msra.mxu0 %v1665
    %2205 = vmatpush.bf16.msra.mxu0 %v1661
    %2206 = vmatpush.bf16.msra.mxu0 %v1657
    %2207 = vmatpush.bf16.msra.mxu0 %v1653
    %2208 = vmatpush.bf16.msra.mxu0 %v1649
    %2209 = vmatmul.bf16.gmra.mxu0 %v610
    %v2210 = vpop.f32.mrf.mxu0
    %v2211 = vadd.f32 %v2198, %v2210
    %v2212 = vpop.f32.mrf.mxu0
    %2213 = vdwg.mxu0
    %2214 = vmatpush.bf16.msra.mxu0 %v1709
    %2215 = vmatpush.bf16.msra.mxu0 %v1705
    %2216 = vmatpush.bf16.msra.mxu0 %v1701
    %2217 = vmatpush.bf16.msra.mxu0 %v1697
    %2218 = vmatpush.bf16.msra.mxu0 %v1693
    %2219 = vmatpush.bf16.msra.mxu0 %v1689
    %2220 = vmatpush.bf16.msra.mxu0 %v1685
    %2221 = vmatpush.bf16.msra.mxu0 %v1681
    %2222 = vmatmul.bf16.gmra.mxu0 %v611
    %v2223 = vpop.f32.mrf.mxu0
    %v2224 = vadd.f32 %v2211, %v2223
    %v2225 = vpop.f32.mrf.mxu0
    %2226 = vdwg.mxu0
    %2227 = vmatpush.bf16.msra.mxu0 %v1741
    %2228 = vmatpush.bf16.msra.mxu0 %v1737
    %2229 = vmatpush.bf16.msra.mxu0 %v1733
    %2230 = vmatpush.bf16.msra.mxu0 %v1729
    %2231 = vmatpush.bf16.msra.mxu0 %v1725
    %2232 = vmatpush.bf16.msra.mxu0 %v1721
    %2233 = vmatpush.bf16.msra.mxu0 %v1717
    %2234 = vmatpush.bf16.msra.mxu0 %v1713
    %2235 = vmatmul.bf16.gmra.mxu0 %v612
    %v2236 = vpop.f32.mrf.mxu0
    %v2237 = vadd.f32 %v2224, %v2236
    %v2238 = vpop.f32.mrf.mxu0
    %2239 = vdwg.mxu0
    %2240 = vmatpush.bf16.msra.mxu0 %v1550
    %2241 = vmatpush.bf16.msra.mxu0 %v1546
    %2242 = vmatpush.bf16.msra.mxu0 %v1542
    %2243 = vmatpush.bf16.msra.mxu0 %v1538
    %2244 = vmatpush.bf16.msra.mxu0 %v1534
    %2245 = vmatpush.bf16.msra.mxu0 %v1530
    %2246 = vmatpush.bf16.msra.mxu0 %v1526
    %2247 = vmatpush.bf16.msra.mxu0 %v1522
    %2248 = vmatmul.bf16.gmra.mxu0 %v606
    %v2249 = vpop.f32.mrf.mxu0
    %v2250 = vadd.f32 %v842, %v2249
    %v2251 = vpop.f32.mrf.mxu0
    %2252 = vdwg.mxu0
    %2253 = vmatpush.bf16.msra.mxu0 %v1582
    %2254 = vmatpush.bf16.msra.mxu0 %v1578
    %2255 = vmatpush.bf16.msra.mxu0 %v1574
    %2256 = vmatpush.bf16.msra.mxu0 %v1570
    %2257 = vmatpush.bf16.msra.mxu0 %v1566
    %2258 = vmatpush.bf16.msra.mxu0 %v1562
    %2259 = vmatpush.bf16.msra.mxu0 %v1558
    %2260 = vmatpush.bf16.msra.mxu0 %v1554
    %2261 = vmatmul.bf16.gmra.mxu0 %v607
    %v2262 = vpop.f32.mrf.mxu0
    %v2263 = vadd.f32 %v2250, %v2262
    %v2264 = vpop.f32.mrf.mxu0
    %2265 = vdwg.mxu0
    %2266 = vmatpush.bf16.msra.mxu0 %v1614
    %2267 = vmatpush.bf16.msra.mxu0 %v1610
    %2268 = vmatpush.bf16.msra.mxu0 %v1606
    %2269 = vmatpush.bf16.msra.mxu0 %v1602
    %2270 = vmatpush.bf16.msra.mxu0 %v1598
    %2271 = vmatpush.bf16.msra.mxu0 %v1594
    %2272 = vmatpush.bf16.msra.mxu0 %v1590
    %2273 = vmatpush.bf16.msra.mxu0 %v1586
    %2274 = vmatmul.bf16.gmra.mxu0 %v608
    %v2275 = vpop.f32.mrf.mxu0
    %v2276 = vadd.f32 %v2263, %v2275
    %v2277 = vpop.f32.mrf.mxu0
    %2278 = vdwg.mxu0
    %2279 = vmatpush.bf16.msra.mxu0 %v1646
    %2280 = vmatpush.bf16.msra.mxu0 %v1642
    %2281 = vmatpush.bf16.msra.mxu0 %v1638
    %2282 = vmatpush.bf16.msra.mxu0 %v1634
    %2283 = vmatpush.bf16.msra.mxu0 %v1630
    %2284 = vmatpush.bf16.msra.mxu0 %v1626
    %2285 = vmatpush.bf16.msra.mxu0 %v1622
    %2286 = vmatpush.bf16.msra.mxu0 %v1618
    %2287 = vmatmul.bf16.gmra.mxu0 %v609
    %v2288 = vpop.f32.mrf.mxu0
    %v2289 = vadd.f32 %v2276, %v2288
    %v2290 = vpop.f32.mrf.mxu0
    %2291 = vdwg.mxu0
    %2292 = vmatpush.bf16.msra.mxu0 %v1678
    %2293 = vmatpush.bf16.msra.mxu0 %v1674
    %2294 = vmatpush.bf16.msra.mxu0 %v1670
    %2295 = vmatpush.bf16.msra.mxu0 %v1666
    %2296 = vmatpush.bf16.msra.mxu0 %v1662
    %2297 = vmatpush.bf16.msra.mxu0 %v1658
    %2298 = vmatpush.bf16.msra.mxu0 %v1654
    %2299 = vmatpush.bf16.msra.mxu0 %v1650
    %2300 = vmatmul.bf16.gmra.mxu0 %v610
    %v2301 = vpop.f32.mrf.mxu0
    %v2302 = vadd.f32 %v2289, %v2301
    %v2303 = vpop.f32.mrf.mxu0
    %2304 = vdwg.mxu0
    %2305 = vmatpush.bf16.msra.mxu0 %v1710
    %2306 = vmatpush.bf16.msra.mxu0 %v1706
    %2307 = vmatpush.bf16.msra.mxu0 %v1702
    %2308 = vmatpush.bf16.msra.mxu0 %v1698
    %2309 = vmatpush.bf16.msra.mxu0 %v1694
    %2310 = vmatpush.bf16.msra.mxu0 %v1690
    %2311 = vmatpush.bf16.msra.mxu0 %v1686
    %2312 = vmatpush.bf16.msra.mxu0 %v1682
    %2313 = vmatmul.bf16.gmra.mxu0 %v611
    %v2314 = vpop.f32.mrf.mxu0
    %v2315 = vadd.f32 %v2302, %v2314
    %v2316 = vpop.f32.mrf.mxu0
    %2317 = vdwg.mxu0
    %2318 = vmatpush.bf16.msra.mxu0 %v1742
    %2319 = vmatpush.bf16.msra.mxu0 %v1738
    %2320 = vmatpush.bf16.msra.mxu0 %v1734
    %2321 = vmatpush.bf16.msra.mxu0 %v1730
    %2322 = vmatpush.bf16.msra.mxu0 %v1726
    %2323 = vmatpush.bf16.msra.mxu0 %v1722
    %2324 = vmatpush.bf16.msra.mxu0 %v1718
    %2325 = vmatpush.bf16.msra.mxu0 %v1714
    %2326 = vmatmul.bf16.gmra.mxu0 %v612
    %v2327 = vpop.f32.mrf.mxu0
    %v2328 = vadd.f32 %v2315, %v2327
    %v2329 = vpop.f32.mrf.mxu0
    %2330 = vdwg.mxu0
    %v2331 = vmax.f32 %v2055, 0.0
    %v2332 = vmax.f32 %v2146, 0.0
    %v2333 = vmax.f32 %v2237, 0.0
    %v2334 = vmax.f32 %v2328, 0.0
    %v2335 = vpack.c.bf16 %v2331, %v2331
    %v2336 = vpack.c.bf16 %v2332, %v2332
    %v2337 = vpack.c.bf16 %v2333, %v2333
    %v2338 = vpack.c.bf16 %v2334, %v2334
    %v2339 = vld [vmem:[#allocation11] sm:$0xff]
    %v2340 = vld [vmem:[#allocation11 + $0x8] sm:$0xff]
    %v2341 = vld [vmem:[#allocation11 + $0x10] sm:$0xff]
    %v2342 = vld [vmem:[#allocation11 + $0x18] sm:$0xff]
    %v2343 = vld [vmem:[#allocation11 + $0x20] sm:$0xff]
    %v2344 = vld [vmem:[#allocation11 + $0x28] sm:$0xff]
    %v2345 = vld [vmem:[#allocation11 + $0x30] sm:$0xff]
    %v2346 = vld [vmem:[#allocation11 + $0x38] sm:$0xff]
    %v2347 = vld [vmem:[#allocation11 + $0x40] sm:$0xff]
    %v2348 = vld [vmem:[#allocation11 + $0x48] sm:$0xff]
    %v2349 = vld [vmem:[#allocation11 + $0x50] sm:$0xff]
    %v2350 = vld [vmem:[#allocation11 + $0x58] sm:$0xff]
    %v2351 = vld [vmem:[#allocation11 + $0x60] sm:$0xff]
    %v2352 = vld [vmem:[#allocation11 + $0x68] sm:$0xff]
    %v2353 = vld [vmem:[#allocation11 + $0x70] sm:$0xff]
    %v2354 = vld [vmem:[#allocation11 + $0x78] sm:$0xff]
    %v2355 = vld [vmem:[#allocation11 + $0x80] sm:$0xff]
    %v2356 = vld [vmem:[#allocation11 + $0x88] sm:$0xff]
    %v2357 = vld [vmem:[#allocation11 + $0x90] sm:$0xff]
    %v2358 = vld [vmem:[#allocation11 + $0x98] sm:$0xff]
    %v2359 = vld [vmem:[#allocation11 + $0xa0] sm:$0xff]
    %v2360 = vld [vmem:[#allocation11 + $0xa8] sm:$0xff]
    %v2361 = vld [vmem:[#allocation11 + $0xb0] sm:$0xff]
    %v2362 = vld [vmem:[#allocation11 + $0xb8] sm:$0xff]
    %v2363 = vld [vmem:[#allocation11 + $0xc0] sm:$0xff]
    %v2364 = vld [vmem:[#allocation11 + $0xc8] sm:$0xff]
    %v2365 = vld [vmem:[#allocation11 + $0xd0] sm:$0xff]
    %v2366 = vld [vmem:[#allocation11 + $0xd8] sm:$0xff]
    %v2367 = vld [vmem:[#allocation11 + $0xe0] sm:$0xff]
    %v2368 = vld [vmem:[#allocation11 + $0xe8] sm:$0xff]
    %v2369 = vld [vmem:[#allocation11 + $0xf0] sm:$0xff]
    %v2370 = vld [vmem:[#allocation11 + $0xf8] sm:$0xff]
    %v2371 = vld [vmem:[#allocation11 + $0x100] sm:$0xff]
    %v2372 = vld [vmem:[#allocation11 + $0x108] sm:$0xff]
    %v2373 = vld [vmem:[#allocation11 + $0x110] sm:$0xff]
    %v2374 = vld [vmem:[#allocation11 + $0x118] sm:$0xff]
    %v2375 = vld [vmem:[#allocation11 + $0x120] sm:$0xff]
    %v2376 = vld [vmem:[#allocation11 + $0x128] sm:$0xff]
    %v2377 = vld [vmem:[#allocation11 + $0x130] sm:$0xff]
    %v2378 = vld [vmem:[#allocation11 + $0x138] sm:$0xff]
    %v2379 = vld [vmem:[#allocation11 + $0x140] sm:$0xff]
    %v2380 = vld [vmem:[#allocation11 + $0x148] sm:$0xff]
    %v2381 = vld [vmem:[#allocation11 + $0x150] sm:$0xff]
    %v2382 = vld [vmem:[#allocation11 + $0x158] sm:$0xff]
    %v2383 = vld [vmem:[#allocation11 + $0x160] sm:$0xff]
    %v2384 = vld [vmem:[#allocation11 + $0x168] sm:$0xff]
    %v2385 = vld [vmem:[#allocation11 + $0x170] sm:$0xff]
    %v2386 = vld [vmem:[#allocation11 + $0x178] sm:$0xff]
    %v2387 = vld [vmem:[#allocation11 + $0x180] sm:$0xff]
    %v2388 = vld [vmem:[#allocation11 + $0x188] sm:$0xff]
    %v2389 = vld [vmem:[#allocation11 + $0x190] sm:$0xff]
    %v2390 = vld [vmem:[#allocation11 + $0x198] sm:$0xff]
    %v2391 = vld [vmem:[#allocation11 + $0x1a0] sm:$0xff]
    %v2392 = vld [vmem:[#allocation11 + $0x1a8] sm:$0xff]
    %v2393 = vld [vmem:[#allocation11 + $0x1b0] sm:$0xff]
    %v2394 = vld [vmem:[#allocation11 + $0x1b8] sm:$0xff]
    %v2395 = vld [vmem:[#allocation11 + $0x1c0] sm:$0xff]
    %v2396 = vld [vmem:[#allocation11 + $0x1c8] sm:$0xff]
    %v2397 = vld [vmem:[#allocation11 + $0x1d0] sm:$0xff]
    %v2398 = vld [vmem:[#allocation11 + $0x1d8] sm:$0xff]
    %v2399 = vld [vmem:[#allocation11 + $0x1e0] sm:$0xff]
    %v2400 = vld [vmem:[#allocation11 + $0x1e8] sm:$0xff]
    %v2401 = vld [vmem:[#allocation11 + $0x1f0] sm:$0xff]
    %v2402 = vld [vmem:[#allocation11 + $0x1f8] sm:$0xff]
    %v2403 = vld [vmem:[%s6] sm:$0x3]
    %v2405 = vperm.slane %v2403, 0
    %v2406 = vperm.slane %v2403, 1
    %v2473 = vunpack.c.l.b16 %v2339
    %v2474 = vunpack.c.h.b16 %v2339
    %v2475 = vunpack.c.l.b16 %v2340
    %v2476 = vunpack.c.h.b16 %v2340
    %v2477 = vunpack.c.l.b16 %v2341
    %v2478 = vunpack.c.h.b16 %v2341
    %v2479 = vunpack.c.l.b16 %v2342
    %v2480 = vunpack.c.h.b16 %v2342
    %v2481 = vunpack.c.l.b16 %v2343
    %v2482 = vunpack.c.h.b16 %v2343
    %v2483 = vunpack.c.l.b16 %v2344
    %v2484 = vunpack.c.h.b16 %v2344
    %v2485 = vunpack.c.l.b16 %v2345
    %v2486 = vunpack.c.h.b16 %v2345
    %v2487 = vunpack.c.l.b16 %v2346
    %v2488 = vunpack.c.h.b16 %v2346
    %v2489 = vunpack.c.l.b16 %v2347
    %v2490 = vunpack.c.h.b16 %v2347
    %v2491 = vunpack.c.l.b16 %v2348
    %v2492 = vunpack.c.h.b16 %v2348
    %v2493 = vunpack.c.l.b16 %v2349
    %v2494 = vunpack.c.h.b16 %v2349
    %v2495 = vunpack.c.l.b16 %v2350
    %v2496 = vunpack.c.h.b16 %v2350
    %v2497 = vunpack.c.l.b16 %v2351
    %v2498 = vunpack.c.h.b16 %v2351
    %v2499 = vunpack.c.l.b16 %v2352
    %v2500 = vunpack.c.h.b16 %v2352
    %v2501 = vunpack.c.l.b16 %v2353
    %v2502 = vunpack.c.h.b16 %v2353
    %v2503 = vunpack.c.l.b16 %v2354
    %v2504 = vunpack.c.h.b16 %v2354
    %v2505 = vunpack.c.l.b16 %v2355
    %v2506 = vunpack.c.h.b16 %v2355
    %v2507 = vunpack.c.l.b16 %v2356
    %v2508 = vunpack.c.h.b16 %v2356
    %v2509 = vunpack.c.l.b16 %v2357
    %v2510 = vunpack.c.h.b16 %v2357
    %v2511 = vunpack.c.l.b16 %v2358
    %v2512 = vunpack.c.h.b16 %v2358
    %v2513 = vunpack.c.l.b16 %v2359
    %v2514 = vunpack.c.h.b16 %v2359
    %v2515 = vunpack.c.l.b16 %v2360
    %v2516 = vunpack.c.h.b16 %v2360
    %v2517 = vunpack.c.l.b16 %v2361
    %v2518 = vunpack.c.h.b16 %v2361
    %v2519 = vunpack.c.l.b16 %v2362
    %v2520 = vunpack.c.h.b16 %v2362
    %v2521 = vunpack.c.l.b16 %v2363
    %v2522 = vunpack.c.h.b16 %v2363
    %v2523 = vunpack.c.l.b16 %v2364
    %v2524 = vunpack.c.h.b16 %v2364
    %v2525 = vunpack.c.l.b16 %v2365
    %v2526 = vunpack.c.h.b16 %v2365
    %v2527 = vunpack.c.l.b16 %v2366
    %v2528 = vunpack.c.h.b16 %v2366
    %v2529 = vunpack.c.l.b16 %v2367
    %v2530 = vunpack.c.h.b16 %v2367
    %v2531 = vunpack.c.l.b16 %v2368
    %v2532 = vunpack.c.h.b16 %v2368
    %v2533 = vunpack.c.l.b16 %v2369
    %v2534 = vunpack.c.h.b16 %v2369
    %v2535 = vunpack.c.l.b16 %v2370
    %v2536 = vunpack.c.h.b16 %v2370
    %v2537 = vunpack.c.l.b16 %v2371
    %v2538 = vunpack.c.h.b16 %v2371
    %v2539 = vunpack.c.l.b16 %v2372
    %v2540 = vunpack.c.h.b16 %v2372
    %v2541 = vunpack.c.l.b16 %v2373
    %v2542 = vunpack.c.h.b16 %v2373
    %v2543 = vunpack.c.l.b16 %v2374
    %v2544 = vunpack.c.h.b16 %v2374
    %v2545 = vunpack.c.l.b16 %v2375
    %v2546 = vunpack.c.h.b16 %v2375
    %v2547 = vunpack.c.l.b16 %v2376
    %v2548 = vunpack.c.h.b16 %v2376
    %v2549 = vunpack.c.l.b16 %v2377
    %v2550 = vunpack.c.h.b16 %v2377
    %v2551 = vunpack.c.l.b16 %v2378
    %v2552 = vunpack.c.h.b16 %v2378
    %v2553 = vunpack.c.l.b16 %v2379
    %v2554 = vunpack.c.h.b16 %v2379
    %v2555 = vunpack.c.l.b16 %v2380
    %v2556 = vunpack.c.h.b16 %v2380
    %v2557 = vunpack.c.l.b16 %v2381
    %v2558 = vunpack.c.h.b16 %v2381
    %v2559 = vunpack.c.l.b16 %v2382
    %v2560 = vunpack.c.h.b16 %v2382
    %v2561 = vunpack.c.l.b16 %v2383
    %v2562 = vunpack.c.h.b16 %v2383
    %v2563 = vunpack.c.l.b16 %v2384
    %v2564 = vunpack.c.h.b16 %v2384
    %v2565 = vunpack.c.l.b16 %v2385
    %v2566 = vunpack.c.h.b16 %v2385
    %v2567 = vunpack.c.l.b16 %v2386
    %v2568 = vunpack.c.h.b16 %v2386
    %v2569 = vunpack.c.l.b16 %v2387
    %v2570 = vunpack.c.h.b16 %v2387
    %v2571 = vunpack.c.l.b16 %v2388
    %v2572 = vunpack.c.h.b16 %v2388
    %v2573 = vunpack.c.l.b16 %v2389
    %v2574 = vunpack.c.h.b16 %v2389
    %v2575 = vunpack.c.l.b16 %v2390
    %v2576 = vunpack.c.h.b16 %v2390
    %v2577 = vunpack.c.l.b16 %v2391
    %v2578 = vunpack.c.h.b16 %v2391
    %v2579 = vunpack.c.l.b16 %v2392
    %v2580 = vunpack.c.h.b16 %v2392
    %v2581 = vunpack.c.l.b16 %v2393
    %v2582 = vunpack.c.h.b16 %v2393
    %v2583 = vunpack.c.l.b16 %v2394
    %v2584 = vunpack.c.h.b16 %v2394
    %v2585 = vunpack.c.l.b16 %v2395
    %v2586 = vunpack.c.h.b16 %v2395
    %v2587 = vunpack.c.l.b16 %v2396
    %v2588 = vunpack.c.h.b16 %v2396
    %v2589 = vunpack.c.l.b16 %v2397
    %v2590 = vunpack.c.h.b16 %v2397
    %v2591 = vunpack.c.l.b16 %v2398
    %v2592 = vunpack.c.h.b16 %v2398
    %v2593 = vunpack.c.l.b16 %v2399
    %v2594 = vunpack.c.h.b16 %v2399
    %v2595 = vunpack.c.l.b16 %v2400
    %v2596 = vunpack.c.h.b16 %v2400
    %v2597 = vunpack.c.l.b16 %v2401
    %v2598 = vunpack.c.h.b16 %v2401
    %v2599 = vunpack.c.l.b16 %v2402
    %v2600 = vunpack.c.h.b16 %v2402
    %v2601 = vpack.c.b16 %v2475, %v2473
    %v2602 = vpack.c.b16 %v2476, %v2474
    %v2603 = vpack.c.b16 %v2479, %v2477
    %v2604 = vpack.c.b16 %v2480, %v2478
    %v2605 = vpack.c.b16 %v2483, %v2481
    %v2606 = vpack.c.b16 %v2484, %v2482
    %v2607 = vpack.c.b16 %v2487, %v2485
    %v2608 = vpack.c.b16 %v2488, %v2486
    %v2609 = vpack.c.b16 %v2491, %v2489
    %v2610 = vpack.c.b16 %v2492, %v2490
    %v2611 = vpack.c.b16 %v2495, %v2493
    %v2612 = vpack.c.b16 %v2496, %v2494
    %v2613 = vpack.c.b16 %v2499, %v2497
    %v2614 = vpack.c.b16 %v2500, %v2498
    %v2615 = vpack.c.b16 %v2503, %v2501
    %v2616 = vpack.c.b16 %v2504, %v2502
    %v2617 = vpack.c.b16 %v2507, %v2505
    %v2618 = vpack.c.b16 %v2508, %v2506
    %v2619 = vpack.c.b16 %v2511, %v2509
    %v2620 = vpack.c.b16 %v2512, %v2510
    %v2621 = vpack.c.b16 %v2515, %v2513
    %v2622 = vpack.c.b16 %v2516, %v2514
    %v2623 = vpack.c.b16 %v2519, %v2517
    %v2624 = vpack.c.b16 %v2520, %v2518
    %v2625 = vpack.c.b16 %v2523, %v2521
    %v2626 = vpack.c.b16 %v2524, %v2522
    %v2627 = vpack.c.b16 %v2527, %v2525
    %v2628 = vpack.c.b16 %v2528, %v2526
    %v2629 = vpack.c.b16 %v2531, %v2529
    %v2630 = vpack.c.b16 %v2532, %v2530
    %v2631 = vpack.c.b16 %v2535, %v2533
    %v2632 = vpack.c.b16 %v2536, %v2534
    %v2633 = vpack.c.b16 %v2539, %v2537
    %v2634 = vpack.c.b16 %v2540, %v2538
    %v2635 = vpack.c.b16 %v2543, %v2541
    %v2636 = vpack.c.b16 %v2544, %v2542
    %v2637 = vpack.c.b16 %v2547, %v2545
    %v2638 = vpack.c.b16 %v2548, %v2546
    %v2639 = vpack.c.b16 %v2551, %v2549
    %v2640 = vpack.c.b16 %v2552, %v2550
    %v2641 = vpack.c.b16 %v2555, %v2553
    %v2642 = vpack.c.b16 %v2556, %v2554
    %v2643 = vpack.c.b16 %v2559, %v2557
    %v2644 = vpack.c.b16 %v2560, %v2558
    %v2645 = vpack.c.b16 %v2563, %v2561
    %v2646 = vpack.c.b16 %v2564, %v2562
    %v2647 = vpack.c.b16 %v2567, %v2565
    %v2648 = vpack.c.b16 %v2568, %v2566
    %v2649 = vpack.c.b16 %v2571, %v2569
    %v2650 = vpack.c.b16 %v2572, %v2570
    %v2651 = vpack.c.b16 %v2575, %v2573
    %v2652 = vpack.c.b16 %v2576, %v2574
    %v2653 = vpack.c.b16 %v2579, %v2577
    %v2654 = vpack.c.b16 %v2580, %v2578
    %v2655 = vpack.c.b16 %v2583, %v2581
    %v2656 = vpack.c.b16 %v2584, %v2582
    %v2657 = vpack.c.b16 %v2587, %v2585
    %v2658 = vpack.c.b16 %v2588, %v2586
    %v2659 = vpack.c.b16 %v2591, %v2589
    %v2660 = vpack.c.b16 %v2592, %v2590
    %v2661 = vpack.c.b16 %v2595, %v2593
    %v2662 = vpack.c.b16 %v2596, %v2594
    %v2663 = vpack.c.b16 %v2599, %v2597
    %v2664 = vpack.c.b16 %v2600, %v2598
    %2729 = vmatpush.bf16.msra.mxu0 %v2615
    %2730 = vmatpush.bf16.msra.mxu0 %v2613
    %2731 = vmatpush.bf16.msra.mxu0 %v2611
    %2732 = vmatpush.bf16.msra.mxu0 %v2609
    %2733 = vmatpush.bf16.msra.mxu0 %v2607
    %2734 = vmatpush.bf16.msra.mxu0 %v2605
    %2735 = vmatpush.bf16.msra.mxu0 %v2603
    %2736 = vmatpush.bf16.msra.mxu0 %v2601
    %2737 = vmatmul.bf16.gmra.mxu0 %v2335
    %v2738 = vpop.f32.mrf.mxu0
    %v2739 = vadd.f32 %v2405, %v2738
    %v2740 = vpop.f32.mrf.mxu0
    %2741 = vdwg.mxu0
    %2742 = vmatpush.bf16.msra.mxu0 %v2631
    %2743 = vmatpush.bf16.msra.mxu0 %v2629
    %2744 = vmatpush.bf16.msra.mxu0 %v2627
    %2745 = vmatpush.bf16.msra.mxu0 %v2625
    %2746 = vmatpush.bf16.msra.mxu0 %v2623
    %2747 = vmatpush.bf16.msra.mxu0 %v2621
    %2748 = vmatpush.bf16.msra.mxu0 %v2619
    %2749 = vmatpush.bf16.msra.mxu0 %v2617
    %2750 = vmatmul.bf16.gmra.mxu0 %v2336
    %v2751 = vpop.f32.mrf.mxu0
    %v2752 = vadd.f32 %v2739, %v2751
    %v2753 = vpop.f32.mrf.mxu0
    %2754 = vdwg.mxu0
    %2755 = vmatpush.bf16.msra.mxu0 %v2647
    %2756 = vmatpush.bf16.msra.mxu0 %v2645
    %2757 = vmatpush.bf16.msra.mxu0 %v2643
    %2758 = vmatpush.bf16.msra.mxu0 %v2641
    %2759 = vmatpush.bf16.msra.mxu0 %v2639
    %2760 = vmatpush.bf16.msra.mxu0 %v2637
    %2761 = vmatpush.bf16.msra.mxu0 %v2635
    %2762 = vmatpush.bf16.msra.mxu0 %v2633
    %2763 = vmatmul.bf16.gmra.mxu0 %v2337
    %v2764 = vpop.f32.mrf.mxu0
    %v2765 = vadd.f32 %v2752, %v2764
    %v2766 = vpop.f32.mrf.mxu0
    %2767 = vdwg.mxu0
    %2768 = vmatpush.bf16.msra.mxu0 %v2663
    %2769 = vmatpush.bf16.msra.mxu0 %v2661
    %2770 = vmatpush.bf16.msra.mxu0 %v2659
    %2771 = vmatpush.bf16.msra.mxu0 %v2657
    %2772 = vmatpush.bf16.msra.mxu0 %v2655
    %2773 = vmatpush.bf16.msra.mxu0 %v2653
    %2774 = vmatpush.bf16.msra.mxu0 %v2651
    %2775 = vmatpush.bf16.msra.mxu0 %v2649
    %2776 = vmatmul.bf16.gmra.mxu0 %v2338
    %v2777 = vpop.f32.mrf.mxu0
    %v2778 = vadd.f32 %v2765, %v2777
    %v2779 = vpop.f32.mrf.mxu0
    %2780 = vdwg.mxu0
    %2781 = vmatpush.bf16.msra.mxu0 %v2616
    %2782 = vmatpush.bf16.msra.mxu0 %v2614
    %2783 = vmatpush.bf16.msra.mxu0 %v2612
    %2784 = vmatpush.bf16.msra.mxu0 %v2610
    %2785 = vmatpush.bf16.msra.mxu0 %v2608
    %2786 = vmatpush.bf16.msra.mxu0 %v2606
    %2787 = vmatpush.bf16.msra.mxu0 %v2604
    %2788 = vmatpush.bf16.msra.mxu0 %v2602
    %2789 = vmatmul.bf16.gmra.mxu0 %v2335
    %v2790 = vpop.f32.mrf.mxu0
    %v2791 = vadd.f32 %v2406, %v2790
    %v2792 = vpop.f32.mrf.mxu0
    %2793 = vdwg.mxu0
    %2794 = vmatpush.bf16.msra.mxu0 %v2632
    %2795 = vmatpush.bf16.msra.mxu0 %v2630
    %2796 = vmatpush.bf16.msra.mxu0 %v2628
    %2797 = vmatpush.bf16.msra.mxu0 %v2626
    %2798 = vmatpush.bf16.msra.mxu0 %v2624
    %2799 = vmatpush.bf16.msra.mxu0 %v2622
    %2800 = vmatpush.bf16.msra.mxu0 %v2620
    %2801 = vmatpush.bf16.msra.mxu0 %v2618
    %2802 = vmatmul.bf16.gmra.mxu0 %v2336
    %v2803 = vpop.f32.mrf.mxu0
    %v2804 = vadd.f32 %v2791, %v2803
    %v2805 = vpop.f32.mrf.mxu0
    %2806 = vdwg.mxu0
    %2807 = vmatpush.bf16.msra.mxu0 %v2648
    %2808 = vmatpush.bf16.msra.mxu0 %v2646
    %2809 = vmatpush.bf16.msra.mxu0 %v2644
    %2810 = vmatpush.bf16.msra.mxu0 %v2642
    %2811 = vmatpush.bf16.msra.mxu0 %v2640
    %2812 = vmatpush.bf16.msra.mxu0 %v2638
    %2813 = vmatpush.bf16.msra.mxu0 %v2636
    %2814 = vmatpush.bf16.msra.mxu0 %v2634
    %2815 = vmatmul.bf16.gmra.mxu0 %v2337
    %v2816 = vpop.f32.mrf.mxu0
    %v2817 = vadd.f32 %v2804, %v2816
    %v2818 = vpop.f32.mrf.mxu0
    %2819 = vdwg.mxu0
    %2820 = vmatpush.bf16.msra.mxu0 %v2664
    %2821 = vmatpush.bf16.msra.mxu0 %v2662
    %2822 = vmatpush.bf16.msra.mxu0 %v2660
    %2823 = vmatpush.bf16.msra.mxu0 %v2658
    %2824 = vmatpush.bf16.msra.mxu0 %v2656
    %2825 = vmatpush.bf16.msra.mxu0 %v2654
    %2826 = vmatpush.bf16.msra.mxu0 %v2652
    %2827 = vmatpush.bf16.msra.mxu0 %v2650
    %2828 = vmatmul.bf16.gmra.mxu0 %v2338
    %v2829 = vpop.f32.mrf.mxu0
    %v2830 = vadd.f32 %v2817, %v2829
    %v2831 = vpop.f32.mrf.mxu0
    %2832 = vdwg.mxu0
    %v2833 = vmax.f32 %v2778, 0.0
    %v2834 = vmax.f32 %v2830, 0.0
    %v2835 = vpack.c.bf16 %v2833, %v2833
    %v2836 = vpack.c.bf16 %v2834, %v2834
    %v2837 = vld [vmem:[#allocation13] sm:$0xf]
    %v2838 = vld [vmem:[#allocation13 + $0x4] sm:$0xf]
    %v2839 = vld [vmem:[#allocation13 + $0x8] sm:$0xf]
    %v2840 = vld [vmem:[#allocation13 + $0xc] sm:$0xf]
    %v2841 = vld [vmem:[#allocation13 + $0x10] sm:$0xf]
    %v2842 = vld [vmem:[#allocation13 + $0x14] sm:$0xf]
    %v2843 = vld [vmem:[#allocation13 + $0x18] sm:$0xf]
    %v2844 = vld [vmem:[#allocation13 + $0x1c] sm:$0xf]
    %v2845 = vld [vmem:[#allocation13 + $0x20] sm:$0xf]
    %v2846 = vld [vmem:[#allocation13 + $0x24] sm:$0xf]
    %v2847 = vld [vmem:[#allocation13 + $0x28] sm:$0xf]
    %v2848 = vld [vmem:[#allocation13 + $0x2c] sm:$0xf]
    %v2849 = vld [vmem:[#allocation13 + $0x30] sm:$0xf]
    %v2850 = vld [vmem:[#allocation13 + $0x34] sm:$0xf]
    %v2851 = vld [vmem:[#allocation13 + $0x38] sm:$0xf]
    %v2852 = vld [vmem:[#allocation13 + $0x3c] sm:$0xf]
    %v2853 = vld [vmem:[#allocation13 + $0x40] sm:$0xf]
    %v2854 = vld [vmem:[#allocation13 + $0x44] sm:$0xf]
    %v2855 = vld [vmem:[#allocation13 + $0x48] sm:$0xf]
    %v2856 = vld [vmem:[#allocation13 + $0x4c] sm:$0xf]
    %v2857 = vld [vmem:[#allocation13 + $0x50] sm:$0xf]
    %v2858 = vld [vmem:[#allocation13 + $0x54] sm:$0xf]
    %v2859 = vld [vmem:[#allocation13 + $0x58] sm:$0xf]
    %v2860 = vld [vmem:[#allocation13 + $0x5c] sm:$0xf]
    %v2861 = vld [vmem:[#allocation13 + $0x60] sm:$0xf]
    %v2862 = vld [vmem:[#allocation13 + $0x64] sm:$0xf]
    %v2863 = vld [vmem:[#allocation13 + $0x68] sm:$0xf]
    %v2864 = vld [vmem:[#allocation13 + $0x6c] sm:$0xf]
    %v2865 = vld [vmem:[#allocation13 + $0x70] sm:$0xf]
    %v2866 = vld [vmem:[#allocation13 + $0x74] sm:$0xf]
    %v2867 = vld [vmem:[#allocation13 + $0x78] sm:$0xf]
    %v2868 = vld [vmem:[#allocation13 + $0x7c] sm:$0xf]
    %v2869 = vld [vmem:[%s8] sm:$0x1]
    %v2871 = vperm.slane %v2869, 0
    %v2905 = vunpack.c.l.b16 %v2837
    %v2906 = vunpack.c.l.b16 %v2838
    %v2907 = vunpack.c.l.b16 %v2839
    %v2908 = vunpack.c.l.b16 %v2840
    %v2909 = vunpack.c.l.b16 %v2841
    %v2910 = vunpack.c.l.b16 %v2842
    %v2911 = vunpack.c.l.b16 %v2843
    %v2912 = vunpack.c.l.b16 %v2844
    %v2913 = vunpack.c.l.b16 %v2845
    %v2914 = vunpack.c.l.b16 %v2846
    %v2915 = vunpack.c.l.b16 %v2847
    %v2916 = vunpack.c.l.b16 %v2848
    %v2917 = vunpack.c.l.b16 %v2849
    %v2918 = vunpack.c.l.b16 %v2850
    %v2919 = vunpack.c.l.b16 %v2851
    %v2920 = vunpack.c.l.b16 %v2852
    %v2921 = vunpack.c.l.b16 %v2853
    %v2922 = vunpack.c.l.b16 %v2854
    %v2923 = vunpack.c.l.b16 %v2855
    %v2924 = vunpack.c.l.b16 %v2856
    %v2925 = vunpack.c.l.b16 %v2857
    %v2926 = vunpack.c.l.b16 %v2858
    %v2927 = vunpack.c.l.b16 %v2859
    %v2928 = vunpack.c.l.b16 %v2860
    %v2929 = vunpack.c.l.b16 %v2861
    %v2930 = vunpack.c.l.b16 %v2862
    %v2931 = vunpack.c.l.b16 %v2863
    %v2932 = vunpack.c.l.b16 %v2864
    %v2933 = vunpack.c.l.b16 %v2865
    %v2934 = vunpack.c.l.b16 %v2866
    %v2935 = vunpack.c.l.b16 %v2867
    %v2936 = vunpack.c.l.b16 %v2868
    %v2937 = vpack.c.b16 %v2906, %v2905
    %v2938 = vpack.c.b16 %v2908, %v2907
    %v2939 = vpack.c.b16 %v2910, %v2909
    %v2940 = vpack.c.b16 %v2912, %v2911
    %v2941 = vpack.c.b16 %v2914, %v2913
    %v2942 = vpack.c.b16 %v2916, %v2915
    %v2943 = vpack.c.b16 %v2918, %v2917
    %v2944 = vpack.c.b16 %v2920, %v2919
    %v2945 = vpack.c.b16 %v2922, %v2921
    %v2946 = vpack.c.b16 %v2924, %v2923
    %v2947 = vpack.c.b16 %v2926, %v2925
    %v2948 = vpack.c.b16 %v2928, %v2927
    %v2949 = vpack.c.b16 %v2930, %v2929
    %v2950 = vpack.c.b16 %v2932, %v2931
    %v2951 = vpack.c.b16 %v2934, %v2933
    %v2952 = vpack.c.b16 %v2936, %v2935
    %2969 = vmatpush.bf16.msra.mxu0 %v2944
    %2970 = vmatpush.bf16.msra.mxu0 %v2943
    %2971 = vmatpush.bf16.msra.mxu0 %v2942
    %2972 = vmatpush.bf16.msra.mxu0 %v2941
    %2973 = vmatpush.bf16.msra.mxu0 %v2940
    %2974 = vmatpush.bf16.msra.mxu0 %v2939
    %2975 = vmatpush.bf16.msra.mxu0 %v2938
    %2976 = vmatpush.bf16.msra.mxu0 %v2937
    %2977 = vmatmul.bf16.gmra.mxu0 %v2835
    %v2978 = vpop.f32.mrf.mxu0
    %v2979 = vadd.f32 %v2871, %v2978
    %v2980 = vpop.f32.mrf.mxu0
    %2981 = vdwg.mxu0
    %2982 = vmatpush.bf16.msra.mxu0 %v2952
    %2983 = vmatpush.bf16.msra.mxu0 %v2951
    %2984 = vmatpush.bf16.msra.mxu0 %v2950
    %2985 = vmatpush.bf16.msra.mxu0 %v2949
    %2986 = vmatpush.bf16.msra.mxu0 %v2948
    %2987 = vmatpush.bf16.msra.mxu0 %v2947
    %2988 = vmatpush.bf16.msra.mxu0 %v2946
    %2989 = vmatpush.bf16.msra.mxu0 %v2945
    %2990 = vmatmul.bf16.gmra.mxu0 %v2836
    %v2991 = vpop.f32.mrf.mxu0
    %v2992 = vadd.f32 %v2979, %v2991
    %v2993 = vpop.f32.mrf.mxu0
    %2994 = vdwg.mxu0
    %2995 = vst [vmem:[#allocation14] sm:$0xff] %v2992
    // Predicated region
    $region66: #{mlp_forward.1} parent=1 // pred_check
      _
    $region67: #{mlp_forward.1} parent=1 // pred_check_branch
      %2997 = sbr.rel (0) target = $region69
    $region68: #{mlp_forward.1} parent=1 // pred_region
      %2999 = vsyncadd [#allocation4], 0
      %s3001 = sshll.u32 [#allocation14], 4
      %s3002 = int_to_ptr.vmem [resolvable:$true] %s3001
      %s3003 = sshll.u32 %s9, 4
      %s3004 = int_to_ptr.hbm [resolvable:$true] %s3003
      %3006 = dma.vmem_to_hbm [thread:$0]  %s3002, 128, %s3004, [#allocation4]
    $region69: #{mlp_forward.1} parent=1 // pred_fallthru
      _
    // Predicated region
    $region70: #{mlp_forward.1} parent=1 // pred_check
      _
    $region71: #{mlp_forward.1} parent=1 // pred_check_branch
      %3008 = sbr.rel (0) target = $region73
    $region72: #{mlp_forward.1} parent=1 // pred_region
      %3010 = dma.done [#allocation4], 128
    $region73: #{mlp_forward.1} parent=1 // pred_fallthru
      _
    %3011 = vsyncpa [#allocation3], 1
    %3012 = vsyncpa [#allocation6], 1
    %3013 = vsyncpa [#allocation9], 1
    %3014 = vsyncpa [#allocation12], 1
    %3015 = vsyncpa [#allocation4], 1

</llo_original>
